<compile_context>
chip_gen: v7x
topology: tpu7x:2x2x1
jax: 0.10.0
libtpu: 0.0.40
codegen_flags: <defaults>
</compile_context>

<pallas_src>
import functools

import jax
import jax.numpy as jnp
import numpy as np
from jax.experimental import pallas as pl
from jax.experimental.pallas import tpu as pltpu

LANE = 128
SUBLANE = 8


def _round_up(x, m):
    return ((x + m - 1) // m) * m


def rnn_kernel(ids_ref, rec_ref, fc_ref, out_ref, xp_ref, *,
               seq_len, batch, vocab_pad, hidden):
    # ---- 1) Fused embedding -> input-projection gather ---------------------
    # rec_ref[:vocab_pad, :] holds proj_table = emb_table @ W_ih + (b_ih+b_hh).
    # Token ids are scalars in SMEM; each (1, H) row is copied into the dense
    # (S*B, H) VMEM scratch (dynamic-sublane load + static aligned store).
    # All S*B copies are independent -> good load/store slot ILP.
    for t in range(seq_len):
        for b in range(batch):
            tok = ids_ref[t, b]
            xp_ref[pl.ds(t * batch + b, 1), :] = rec_ref[pl.ds(tok, 1), :]

    w_hh = rec_ref[pl.ds(vocab_pad, hidden), :]          # (H, H)

    # ---- 2) Recurrence: h_{t+1} = tanh(x_proj[t] + h_t @ W_hh) -------------
    # h0 == 0 -> first step is just tanh(x_proj[0]) (saves one matmul).
    h = jnp.tanh(xp_ref[pl.ds(0, batch), :])
    for t in range(1, seq_len):
        xp_t = xp_ref[pl.ds(t * batch, batch), :]
        h = jnp.tanh(
            xp_t + jnp.dot(h, w_hh, preferred_element_type=jnp.float32))

    # ---- 3) Final Linear on the last hidden state ---------------------------
    # fc slab = [W_fc (H, 128-padded) ; b_fc (1, 128-padded)] -> lane-dense,
    # unmasked output store; real O columns are sliced outside the kernel.
    w_fc = fc_ref[pl.ds(0, hidden), :]
    b_fc = fc_ref[pl.ds(hidden, 1), :]
    out_ref[...] = (
        jnp.dot(h, w_fc, preferred_element_type=jnp.float32) + b_fc
    ).astype(out_ref.dtype)


def prepare_params(emb_table, w_ih, w_hh, b_ih, b_hh, w_fc, b_fc):
    """One-time parameter preparation (NOT executed per forward call)."""
    vocab = emb_table.shape[0]
    hidden = w_hh.shape[0]
    out_dim = w_fc.shape[1]
    vocab_pad = _round_up(vocab, SUBLANE)
    out_pad = _round_up(out_dim, LANE)

    # Commute the embedding gather through W_ih and fold both RNN biases:
    #   proj_table[v] = emb_table[v] @ W_ih + (b_ih + b_hh)
    proj = emb_table @ w_ih + (b_ih + b_hh)[None, :]
    proj_p = jnp.zeros((vocab_pad, hidden), jnp.float32).at[:vocab].set(proj)

    # Recurrent slab: [proj_table ; W_hh]  (H lanes wide).
    rec_slab = jnp.concatenate([proj_p, w_hh], axis=0)        # (V_pad + H, H)

    # FC slab: [W_fc ; b_fc], zero-padded to 128 lanes.
    fc_slab = jnp.zeros((hidden + 1, out_pad), jnp.float32)
    fc_slab = fc_slab.at[:hidden, :out_dim].set(w_fc)
    fc_slab = fc_slab.at[hidden, :out_dim].set(b_fc)

    meta = dict(vocab_pad=vocab_pad, hidden=hidden,
                out_dim=out_dim, out_pad=out_pad)
    return rec_slab, fc_slab, meta


def rnn_forward(text, rec_slab, fc_slab, meta):
    """text: [S, B] int32, TIME-MAJOR (like torch nn.RNN default).
    Returns fc(final hidden): [B, O] float32."""
    S, B = text.shape
    H = meta["hidden"]
    V_pad = meta["vocab_pad"]
    O_pad = meta["out_pad"]

    kernel = functools.partial(rnn_kernel, seq_len=S, batch=B,
                               vocab_pad=V_pad, hidden=H)

    out_padded = pl.pallas_call(
        kernel,
        out_shape=jax.ShapeDtypeStruct((B, O_pad), jnp.float32),
        grid_spec=pltpu.PrefetchScalarGridSpec(
            num_scalar_prefetch=1,                            # token ids -> SMEM
            grid=(1,),                                        # single invocation
            in_specs=[
                pl.BlockSpec((V_pad + H, H), lambda i, ids: (0, 0)),   # rec slab
                pl.BlockSpec((H + 1, O_pad), lambda i, ids: (0, 0)),   # fc slab
            ],
            out_specs=pl.BlockSpec((B, O_pad), lambda i, ids: (0, 0)),
            scratch_shapes=[pltpu.VMEM((S * B, H), jnp.float32)],
        ),
        compiler_params=pltpu.CompilerParams(
            dimension_semantics=("arbitrary",),
        ),
    )(text, rec_slab, fc_slab)

    return out_padded[:, :meta["out_dim"]]


def reference_forward(text, emb_table, w_ih, w_hh, b_ih, b_hh, w_fc, b_fc):
    """Pure-JAX reference matching torch.nn.RNN(tanh) + Linear semantics."""
    embedded = jnp.take(emb_table, text, axis=0)              # (S, B, E)
    B = text.shape[1]
    H = w_hh.shape[0]

    def step(h, x_t):
        h_new = jnp.tanh(x_t @ w_ih + h @ w_hh + b_ih + b_hh)
        return h_new, None

    h0 = jnp.zeros((B, H), jnp.float32)
    h_final, _ = jax.lax.scan(step, h0, embedded)
    return h_final @ w_fc + b_fc


if __name__ == "__main__":
    # Module hyperparameters (small, deterministic).
    INPUT_DIM = 50       # vocab size
    EMBEDDING_DIM = 32
    HIDDEN_DIM = 32
    OUTPUT_DIM = 8
    SEQ_LEN = 8
    BATCH = 8            # fills f32 vreg sublanes

    key = jax.random.PRNGKey(0)
    k_emb, k_ih, k_hh, k_bih, k_bhh, k_fc, k_bfc, k_text = jax.random.split(key, 8)

    # Deterministic parameter init (shapes follow the torch module; W_* stored
    # pre-transposed relative to torch: torch W_ih is [H, E] -> here [E, H]).
    emb_table = jax.random.normal(k_emb, (INPUT_DIM, EMBEDDING_DIM), jnp.float32)
    s = 1.0 / np.sqrt(HIDDEN_DIM)
    w_ih = jax.random.uniform(k_ih, (EMBEDDING_DIM, HIDDEN_DIM), jnp.float32, -s, s)
    w_hh = jax.random.uniform(k_hh, (HIDDEN_DIM, HIDDEN_DIM), jnp.float32, -s, s)
    b_ih = jax.random.uniform(k_bih, (HIDDEN_DIM,), jnp.float32, -s, s)
    b_hh = jax.random.uniform(k_bhh, (HIDDEN_DIM,), jnp.float32, -s, s)
    w_fc = jax.random.uniform(k_fc, (HIDDEN_DIM, OUTPUT_DIM), jnp.float32, -s, s)
    b_fc = jax.random.uniform(k_bfc, (OUTPUT_DIM,), jnp.float32, -s, s)

    # One-time parameter preparation (gather-commuted proj table, slabs).
    rec_slab, fc_slab, meta = prepare_params(
        emb_table, w_ih, w_hh, b_ih, b_hh, w_fc, b_fc)

    # Input token ids, seq-first [S, B] like torch default nn.RNN.
    text = jax.random.randint(k_text, (SEQ_LEN, BATCH), 0, INPUT_DIM, jnp.int32)

    out = jax.block_until_ready(rnn_forward(text, rec_slab, fc_slab, meta))
    ref = jax.block_until_ready(
        reference_forward(text, emb_table, w_ih, w_hh, b_ih, b_hh, w_fc, b_fc))

    assert out.shape == (BATCH, OUTPUT_DIM)
    assert np.allclose(np.asarray(out), np.asarray(ref), atol=1e-4, rtol=1e-4)

    print("KERNEL_OK")
</pallas_src>

<mosaic_0001>
module attributes {stable_mosaic.version = 11 : i64} {
  func.func @rnn_kernel(%arg0: i32, %arg1: memref<8x8xi32, #tpu.memory_space<smem>>, %arg2: memref<88x32xf32, #tpu.memory_space<vmem>>, %arg3: memref<33x128xf32, #tpu.memory_space<vmem>>, %arg4: memref<8x128xf32, #tpu.memory_space<vmem>>, %arg5: memref<64x32xf32, #tpu.memory_space<vmem>>) attributes {dimension_semantics = [#tpu.dimension_semantics<arbitrary>], iteration_bounds = array<i64: 1>, scalar_prefetch = 1 : i64, scratch_operands = 1 : i64, tpu.core_type = #tpu.core_type<tc>, window_params = [{pipeline_mode = #tpu.pipeline_mode<synchronous>, transform_indices = @transform_0, window_bounds = array<i64: 88, 32>}, {pipeline_mode = #tpu.pipeline_mode<synchronous>, transform_indices = @transform_1, window_bounds = array<i64: 33, 128>}, {pipeline_mode = #tpu.pipeline_mode<synchronous>, transform_indices = @transform_2, window_bounds = array<i64: 8, 128>}]} {
    %c0 = arith.constant 0 : index
    %c0_0 = arith.constant 0 : index
    %0 = memref.load %arg1[%c0, %c0_0] : memref<8x8xi32, #tpu.memory_space<smem>>
    %1 = arith.index_cast %0 : i32 to index
    %c0_1 = arith.constant 0 : index
    %2 = vector.load %arg2[%1, %c0_1] : memref<88x32xf32, #tpu.memory_space<vmem>>, vector<1x32xf32>
    %c0_2 = arith.constant 0 : index
    %c0_3 = arith.constant 0 : index
    %3 = vector.load %arg5[%c0_2, %c0_3] : memref<64x32xf32, #tpu.memory_space<vmem>>, vector<1x32xf32>
    tpu.vector_store %arg5[%c0_2, %c0_3], %2 {strides = array<i32>} : memref<64x32xf32, #tpu.memory_space<vmem>>, vector<1x32xf32>,
    %c0_4 = arith.constant 0 : index
    %c1 = arith.constant 1 : index
    %4 = memref.load %arg1[%c0_4, %c1] : memref<8x8xi32, #tpu.memory_space<smem>>
    %5 = arith.index_cast %4 : i32 to index
    %c0_5 = arith.constant 0 : index
    %6 = vector.load %arg2[%5, %c0_5] : memref<88x32xf32, #tpu.memory_space<vmem>>, vector<1x32xf32>
    %c1_6 = arith.constant 1 : index
    %c0_7 = arith.constant 0 : index
    %7 = vector.load %arg5[%c1_6, %c0_7] : memref<64x32xf32, #tpu.memory_space<vmem>>, vector<1x32xf32>
    tpu.vector_store %arg5[%c1_6, %c0_7], %6 {strides = array<i32>} : memref<64x32xf32, #tpu.memory_space<vmem>>, vector<1x32xf32>,
    %c0_8 = arith.constant 0 : index
    %c2 = arith.constant 2 : index
    %8 = memref.load %arg1[%c0_8, %c2] : memref<8x8xi32, #tpu.memory_space<smem>>
    %9 = arith.index_cast %8 : i32 to index
    %c0_9 = arith.constant 0 : index
    %10 = vector.load %arg2[%9, %c0_9] : memref<88x32xf32, #tpu.memory_space<vmem>>, vector<1x32xf32>
    %c2_10 = arith.constant 2 : index
    %c0_11 = arith.constant 0 : index
    %11 = vector.load %arg5[%c2_10, %c0_11] : memref<64x32xf32, #tpu.memory_space<vmem>>, vector<1x32xf32>
    tpu.vector_store %arg5[%c2_10, %c0_11], %10 {strides = array<i32>} : memref<64x32xf32, #tpu.memory_space<vmem>>, vector<1x32xf32>,
    %c0_12 = arith.constant 0 : index
    %c3 = arith.constant 3 : index
    %12 = memref.load %arg1[%c0_12, %c3] : memref<8x8xi32, #tpu.memory_space<smem>>
    %13 = arith.index_cast %12 : i32 to index
    %c0_13 = arith.constant 0 : index
    %14 = vector.load %arg2[%13, %c0_13] : memref<88x32xf32, #tpu.memory_space<vmem>>, vector<1x32xf32>
    %c3_14 = arith.constant 3 : index
    %c0_15 = arith.constant 0 : index
    %15 = vector.load %arg5[%c3_14, %c0_15] : memref<64x32xf32, #tpu.memory_space<vmem>>, vector<1x32xf32>
    tpu.vector_store %arg5[%c3_14, %c0_15], %14 {strides = array<i32>} : memref<64x32xf32, #tpu.memory_space<vmem>>, vector<1x32xf32>,
    %c0_16 = arith.constant 0 : index
    %c4 = arith.constant 4 : index
    %16 = memref.load %arg1[%c0_16, %c4] : memref<8x8xi32, #tpu.memory_space<smem>>
    %17 = arith.index_cast %16 : i32 to index
    %c0_17 = arith.constant 0 : index
    %18 = vector.load %arg2[%17, %c0_17] : memref<88x32xf32, #tpu.memory_space<vmem>>, vector<1x32xf32>
    %c4_18 = arith.constant 4 : index
    %c0_19 = arith.constant 0 : index
    %19 = vector.load %arg5[%c4_18, %c0_19] : memref<64x32xf32, #tpu.memory_space<vmem>>, vector<1x32xf32>
    tpu.vector_store %arg5[%c4_18, %c0_19], %18 {strides = array<i32>} : memref<64x32xf32, #tpu.memory_space<vmem>>, vector<1x32xf32>,
    %c0_20 = arith.constant 0 : index
    %c5 = arith.constant 5 : index
    %20 = memref.load %arg1[%c0_20, %c5] : memref<8x8xi32, #tpu.memory_space<smem>>
    %21 = arith.index_cast %20 : i32 to index
    %c0_21 = arith.constant 0 : index
    %22 = vector.load %arg2[%21, %c0_21] : memref<88x32xf32, #tpu.memory_space<vmem>>, vector<1x32xf32>
    %c5_22 = arith.constant 5 : index
    %c0_23 = arith.constant 0 : index
    %23 = vector.load %arg5[%c5_22, %c0_23] : memref<64x32xf32, #tpu.memory_space<vmem>>, vector<1x32xf32>
    tpu.vector_store %arg5[%c5_22, %c0_23], %22 {strides = array<i32>} : memref<64x32xf32, #tpu.memory_space<vmem>>, vector<1x32xf32>,
    %c0_24 = arith.constant 0 : index
    %c6 = arith.constant 6 : index
    %24 = memref.load %arg1[%c0_24, %c6] : memref<8x8xi32, #tpu.memory_space<smem>>
    %25 = arith.index_cast %24 : i32 to index
    %c0_25 = arith.constant 0 : index
    %26 = vector.load %arg2[%25, %c0_25] : memref<88x32xf32, #tpu.memory_space<vmem>>, vector<1x32xf32>
    %c6_26 = arith.constant 6 : index
    %c0_27 = arith.constant 0 : index
    %27 = vector.load %arg5[%c6_26, %c0_27] : memref<64x32xf32, #tpu.memory_space<vmem>>, vector<1x32xf32>
    tpu.vector_store %arg5[%c6_26, %c0_27], %26 {strides = array<i32>} : memref<64x32xf32, #tpu.memory_space<vmem>>, vector<1x32xf32>,
    %c0_28 = arith.constant 0 : index
    %c7 = arith.constant 7 : index
    %28 = memref.load %arg1[%c0_28, %c7] : memref<8x8xi32, #tpu.memory_space<smem>>
    %29 = arith.index_cast %28 : i32 to index
    %c0_29 = arith.constant 0 : index
    %30 = vector.load %arg2[%29, %c0_29] : memref<88x32xf32, #tpu.memory_space<vmem>>, vector<1x32xf32>
    %c7_30 = arith.constant 7 : index
    %c0_31 = arith.constant 0 : index
    %31 = vector.load %arg5[%c7_30, %c0_31] : memref<64x32xf32, #tpu.memory_space<vmem>>, vector<1x32xf32>
    tpu.vector_store %arg5[%c7_30, %c0_31], %30 {strides = array<i32>} : memref<64x32xf32, #tpu.memory_space<vmem>>, vector<1x32xf32>,
    %c1_32 = arith.constant 1 : index
    %c0_33 = arith.constant 0 : index
    %32 = memref.load %arg1[%c1_32, %c0_33] : memref<8x8xi32, #tpu.memory_space<smem>>
    %33 = arith.index_cast %32 : i32 to index
    %c0_34 = arith.constant 0 : index
    %34 = vector.load %arg2[%33, %c0_34] : memref<88x32xf32, #tpu.memory_space<vmem>>, vector<1x32xf32>
    %c8 = arith.constant 8 : index
    %c0_35 = arith.constant 0 : index
    %35 = vector.load %arg5[%c8, %c0_35] : memref<64x32xf32, #tpu.memory_space<vmem>>, vector<1x32xf32>
    tpu.vector_store %arg5[%c8, %c0_35], %34 {strides = array<i32>} : memref<64x32xf32, #tpu.memory_space<vmem>>, vector<1x32xf32>,
    %c1_36 = arith.constant 1 : index
    %c1_37 = arith.constant 1 : index
    %36 = memref.load %arg1[%c1_36, %c1_37] : memref<8x8xi32, #tpu.memory_space<smem>>
    %37 = arith.index_cast %36 : i32 to index
    %c0_38 = arith.constant 0 : index
    %38 = vector.load %arg2[%37, %c0_38] : memref<88x32xf32, #tpu.memory_space<vmem>>, vector<1x32xf32>
    %c9 = arith.constant 9 : index
    %c0_39 = arith.constant 0 : index
    %39 = vector.load %arg5[%c9, %c0_39] : memref<64x32xf32, #tpu.memory_space<vmem>>, vector<1x32xf32>
    tpu.vector_store %arg5[%c9, %c0_39], %38 {strides = array<i32>} : memref<64x32xf32, #tpu.memory_space<vmem>>, vector<1x32xf32>,
    %c1_40 = arith.constant 1 : index
    %c2_41 = arith.constant 2 : index
    %40 = memref.load %arg1[%c1_40, %c2_41] : memref<8x8xi32, #tpu.memory_space<smem>>
    %41 = arith.index_cast %40 : i32 to index
    %c0_42 = arith.constant 0 : index
    %42 = vector.load %arg2[%41, %c0_42] : memref<88x32xf32, #tpu.memory_space<vmem>>, vector<1x32xf32>
    %c10 = arith.constant 10 : index
    %c0_43 = arith.constant 0 : index
    %43 = vector.load %arg5[%c10, %c0_43] : memref<64x32xf32, #tpu.memory_space<vmem>>, vector<1x32xf32>
    tpu.vector_store %arg5[%c10, %c0_43], %42 {strides = array<i32>} : memref<64x32xf32, #tpu.memory_space<vmem>>, vector<1x32xf32>,
    %c1_44 = arith.constant 1 : index
    %c3_45 = arith.constant 3 : index
    %44 = memref.load %arg1[%c1_44, %c3_45] : memref<8x8xi32, #tpu.memory_space<smem>>
    %45 = arith.index_cast %44 : i32 to index
    %c0_46 = arith.constant 0 : index
    %46 = vector.load %arg2[%45, %c0_46] : memref<88x32xf32, #tpu.memory_space<vmem>>, vector<1x32xf32>
    %c11 = arith.constant 11 : index
    %c0_47 = arith.constant 0 : index
    %47 = vector.load %arg5[%c11, %c0_47] : memref<64x32xf32, #tpu.memory_space<vmem>>, vector<1x32xf32>
    tpu.vector_store %arg5[%c11, %c0_47], %46 {strides = array<i32>} : memref<64x32xf32, #tpu.memory_space<vmem>>, vector<1x32xf32>,
    %c1_48 = arith.constant 1 : index
    %c4_49 = arith.constant 4 : index
    %48 = memref.load %arg1[%c1_48, %c4_49] : memref<8x8xi32, #tpu.memory_space<smem>>
    %49 = arith.index_cast %48 : i32 to index
    %c0_50 = arith.constant 0 : index
    %50 = vector.load %arg2[%49, %c0_50] : memref<88x32xf32, #tpu.memory_space<vmem>>, vector<1x32xf32>
    %c12 = arith.constant 12 : index
    %c0_51 = arith.constant 0 : index
    %51 = vector.load %arg5[%c12, %c0_51] : memref<64x32xf32, #tpu.memory_space<vmem>>, vector<1x32xf32>
    tpu.vector_store %arg5[%c12, %c0_51], %50 {strides = array<i32>} : memref<64x32xf32, #tpu.memory_space<vmem>>, vector<1x32xf32>,
    %c1_52 = arith.constant 1 : index
    %c5_53 = arith.constant 5 : index
    %52 = memref.load %arg1[%c1_52, %c5_53] : memref<8x8xi32, #tpu.memory_space<smem>>
    %53 = arith.index_cast %52 : i32 to index
    %c0_54 = arith.constant 0 : index
    %54 = vector.load %arg2[%53, %c0_54] : memref<88x32xf32, #tpu.memory_space<vmem>>, vector<1x32xf32>
    %c13 = arith.constant 13 : index
    %c0_55 = arith.constant 0 : index
    %55 = vector.load %arg5[%c13, %c0_55] : memref<64x32xf32, #tpu.memory_space<vmem>>, vector<1x32xf32>
    tpu.vector_store %arg5[%c13, %c0_55], %54 {strides = array<i32>} : memref<64x32xf32, #tpu.memory_space<vmem>>, vector<1x32xf32>,
    %c1_56 = arith.constant 1 : index
    %c6_57 = arith.constant 6 : index
    %56 = memref.load %arg1[%c1_56, %c6_57] : memref<8x8xi32, #tpu.memory_space<smem>>
    %57 = arith.index_cast %56 : i32 to index
    %c0_58 = arith.constant 0 : index
    %58 = vector.load %arg2[%57, %c0_58] : memref<88x32xf32, #tpu.memory_space<vmem>>, vector<1x32xf32>
    %c14 = arith.constant 14 : index
    %c0_59 = arith.constant 0 : index
    %59 = vector.load %arg5[%c14, %c0_59] : memref<64x32xf32, #tpu.memory_space<vmem>>, vector<1x32xf32>
    tpu.vector_store %arg5[%c14, %c0_59], %58 {strides = array<i32>} : memref<64x32xf32, #tpu.memory_space<vmem>>, vector<1x32xf32>,
    %c1_60 = arith.constant 1 : index
    %c7_61 = arith.constant 7 : index
    %60 = memref.load %arg1[%c1_60, %c7_61] : memref<8x8xi32, #tpu.memory_space<smem>>
    %61 = arith.index_cast %60 : i32 to index
    %c0_62 = arith.constant 0 : index
    %62 = vector.load %arg2[%61, %c0_62] : memref<88x32xf32, #tpu.memory_space<vmem>>, vector<1x32xf32>
    %c15 = arith.constant 15 : index
    %c0_63 = arith.constant 0 : index
    %63 = vector.load %arg5[%c15, %c0_63] : memref<64x32xf32, #tpu.memory_space<vmem>>, vector<1x32xf32>
    tpu.vector_store %arg5[%c15, %c0_63], %62 {strides = array<i32>} : memref<64x32xf32, #tpu.memory_space<vmem>>, vector<1x32xf32>,
    %c2_64 = arith.constant 2 : index
    %c0_65 = arith.constant 0 : index
    %64 = memref.load %arg1[%c2_64, %c0_65] : memref<8x8xi32, #tpu.memory_space<smem>>
    %65 = arith.index_cast %64 : i32 to index
    %c0_66 = arith.constant 0 : index
    %66 = vector.load %arg2[%65, %c0_66] : memref<88x32xf32, #tpu.memory_space<vmem>>, vector<1x32xf32>
    %c16 = arith.constant 16 : index
    %c0_67 = arith.constant 0 : index
    %67 = vector.load %arg5[%c16, %c0_67] : memref<64x32xf32, #tpu.memory_space<vmem>>, vector<1x32xf32>
    tpu.vector_store %arg5[%c16, %c0_67], %66 {strides = array<i32>} : memref<64x32xf32, #tpu.memory_space<vmem>>, vector<1x32xf32>,
    %c2_68 = arith.constant 2 : index
    %c1_69 = arith.constant 1 : index
    %68 = memref.load %arg1[%c2_68, %c1_69] : memref<8x8xi32, #tpu.memory_space<smem>>
    %69 = arith.index_cast %68 : i32 to index
    %c0_70 = arith.constant 0 : index
    %70 = vector.load %arg2[%69, %c0_70] : memref<88x32xf32, #tpu.memory_space<vmem>>, vector<1x32xf32>
    %c17 = arith.constant 17 : index
    %c0_71 = arith.constant 0 : index
    %71 = vector.load %arg5[%c17, %c0_71] : memref<64x32xf32, #tpu.memory_space<vmem>>, vector<1x32xf32>
    tpu.vector_store %arg5[%c17, %c0_71], %70 {strides = array<i32>} : memref<64x32xf32, #tpu.memory_space<vmem>>, vector<1x32xf32>,
    %c2_72 = arith.constant 2 : index
    %c2_73 = arith.constant 2 : index
    %72 = memref.load %arg1[%c2_72, %c2_73] : memref<8x8xi32, #tpu.memory_space<smem>>
    %73 = arith.index_cast %72 : i32 to index
    %c0_74 = arith.constant 0 : index
    %74 = vector.load %arg2[%73, %c0_74] : memref<88x32xf32, #tpu.memory_space<vmem>>, vector<1x32xf32>
    %c18 = arith.constant 18 : index
    %c0_75 = arith.constant 0 : index
    %75 = vector.load %arg5[%c18, %c0_75] : memref<64x32xf32, #tpu.memory_space<vmem>>, vector<1x32xf32>
    tpu.vector_store %arg5[%c18, %c0_75], %74 {strides = array<i32>} : memref<64x32xf32, #tpu.memory_space<vmem>>, vector<1x32xf32>,
    %c2_76 = arith.constant 2 : index
    %c3_77 = arith.constant 3 : index
    %76 = memref.load %arg1[%c2_76, %c3_77] : memref<8x8xi32, #tpu.memory_space<smem>>
    %77 = arith.index_cast %76 : i32 to index
    %c0_78 = arith.constant 0 : index
    %78 = vector.load %arg2[%77, %c0_78] : memref<88x32xf32, #tpu.memory_space<vmem>>, vector<1x32xf32>
    %c19 = arith.constant 19 : index
    %c0_79 = arith.constant 0 : index
    %79 = vector.load %arg5[%c19, %c0_79] : memref<64x32xf32, #tpu.memory_space<vmem>>, vector<1x32xf32>
    tpu.vector_store %arg5[%c19, %c0_79], %78 {strides = array<i32>} : memref<64x32xf32, #tpu.memory_space<vmem>>, vector<1x32xf32>,
    %c2_80 = arith.constant 2 : index
    %c4_81 = arith.constant 4 : index
    %80 = memref.load %arg1[%c2_80, %c4_81] : memref<8x8xi32, #tpu.memory_space<smem>>
    %81 = arith.index_cast %80 : i32 to index
    %c0_82 = arith.constant 0 : index
    %82 = vector.load %arg2[%81, %c0_82] : memref<88x32xf32, #tpu.memory_space<vmem>>, vector<1x32xf32>
    %c20 = arith.constant 20 : index
    %c0_83 = arith.constant 0 : index
    %83 = vector.load %arg5[%c20, %c0_83] : memref<64x32xf32, #tpu.memory_space<vmem>>, vector<1x32xf32>
    tpu.vector_store %arg5[%c20, %c0_83], %82 {strides = array<i32>} : memref<64x32xf32, #tpu.memory_space<vmem>>, vector<1x32xf32>,
    %c2_84 = arith.constant 2 : index
    %c5_85 = arith.constant 5 : index
    %84 = memref.load %arg1[%c2_84, %c5_85] : memref<8x8xi32, #tpu.memory_space<smem>>
    %85 = arith.index_cast %84 : i32 to index
    %c0_86 = arith.constant 0 : index
    %86 = vector.load %arg2[%85, %c0_86] : memref<88x32xf32, #tpu.memory_space<vmem>>, vector<1x32xf32>
    %c21 = arith.constant 21 : index
    %c0_87 = arith.constant 0 : index
    %87 = vector.load %arg5[%c21, %c0_87] : memref<64x32xf32, #tpu.memory_space<vmem>>, vector<1x32xf32>
    tpu.vector_store %arg5[%c21, %c0_87], %86 {strides = array<i32>} : memref<64x32xf32, #tpu.memory_space<vmem>>, vector<1x32xf32>,
    %c2_88 = arith.constant 2 : index
    %c6_89 = arith.constant 6 : index
    %88 = memref.load %arg1[%c2_88, %c6_89] : memref<8x8xi32, #tpu.memory_space<smem>>
    %89 = arith.index_cast %88 : i32 to index
    %c0_90 = arith.constant 0 : index
    %90 = vector.load %arg2[%89, %c0_90] : memref<88x32xf32, #tpu.memory_space<vmem>>, vector<1x32xf32>
    %c22 = arith.constant 22 : index
    %c0_91 = arith.constant 0 : index
    %91 = vector.load %arg5[%c22, %c0_91] : memref<64x32xf32, #tpu.memory_space<vmem>>, vector<1x32xf32>
    tpu.vector_store %arg5[%c22, %c0_91], %90 {strides = array<i32>} : memref<64x32xf32, #tpu.memory_space<vmem>>, vector<1x32xf32>,
    %c2_92 = arith.constant 2 : index
    %c7_93 = arith.constant 7 : index
    %92 = memref.load %arg1[%c2_92, %c7_93] : memref<8x8xi32, #tpu.memory_space<smem>>
    %93 = arith.index_cast %92 : i32 to index
    %c0_94 = arith.constant 0 : index
    %94 = vector.load %arg2[%93, %c0_94] : memref<88x32xf32, #tpu.memory_space<vmem>>, vector<1x32xf32>
    %c23 = arith.constant 23 : index
    %c0_95 = arith.constant 0 : index
    %95 = vector.load %arg5[%c23, %c0_95] : memref<64x32xf32, #tpu.memory_space<vmem>>, vector<1x32xf32>
    tpu.vector_store %arg5[%c23, %c0_95], %94 {strides = array<i32>} : memref<64x32xf32, #tpu.memory_space<vmem>>, vector<1x32xf32>,
    %c3_96 = arith.constant 3 : index
    %c0_97 = arith.constant 0 : index
    %96 = memref.load %arg1[%c3_96, %c0_97] : memref<8x8xi32, #tpu.memory_space<smem>>
    %97 = arith.index_cast %96 : i32 to index
    %c0_98 = arith.constant 0 : index
    %98 = vector.load %arg2[%97, %c0_98] : memref<88x32xf32, #tpu.memory_space<vmem>>, vector<1x32xf32>
    %c24 = arith.constant 24 : index
    %c0_99 = arith.constant 0 : index
    %99 = vector.load %arg5[%c24, %c0_99] : memref<64x32xf32, #tpu.memory_space<vmem>>, vector<1x32xf32>
    tpu.vector_store %arg5[%c24, %c0_99], %98 {strides = array<i32>} : memref<64x32xf32, #tpu.memory_space<vmem>>, vector<1x32xf32>,
    %c3_100 = arith.constant 3 : index
    %c1_101 = arith.constant 1 : index
    %100 = memref.load %arg1[%c3_100, %c1_101] : memref<8x8xi32, #tpu.memory_space<smem>>
    %101 = arith.index_cast %100 : i32 to index
    %c0_102 = arith.constant 0 : index
    %102 = vector.load %arg2[%101, %c0_102] : memref<88x32xf32, #tpu.memory_space<vmem>>, vector<1x32xf32>
    %c25 = arith.constant 25 : index
    %c0_103 = arith.constant 0 : index
    %103 = vector.load %arg5[%c25, %c0_103] : memref<64x32xf32, #tpu.memory_space<vmem>>, vector<1x32xf32>
    tpu.vector_store %arg5[%c25, %c0_103], %102 {strides = array<i32>} : memref<64x32xf32, #tpu.memory_space<vmem>>, vector<1x32xf32>,
    %c3_104 = arith.constant 3 : index
    %c2_105 = arith.constant 2 : index
    %104 = memref.load %arg1[%c3_104, %c2_105] : memref<8x8xi32, #tpu.memory_space<smem>>
    %105 = arith.index_cast %104 : i32 to index
    %c0_106 = arith.constant 0 : index
    %106 = vector.load %arg2[%105, %c0_106] : memref<88x32xf32, #tpu.memory_space<vmem>>, vector<1x32xf32>
    %c26 = arith.constant 26 : index
    %c0_107 = arith.constant 0 : index
    %107 = vector.load %arg5[%c26, %c0_107] : memref<64x32xf32, #tpu.memory_space<vmem>>, vector<1x32xf32>
    tpu.vector_store %arg5[%c26, %c0_107], %106 {strides = array<i32>} : memref<64x32xf32, #tpu.memory_space<vmem>>, vector<1x32xf32>,
    %c3_108 = arith.constant 3 : index
    %c3_109 = arith.constant 3 : index
    %108 = memref.load %arg1[%c3_108, %c3_109] : memref<8x8xi32, #tpu.memory_space<smem>>
    %109 = arith.index_cast %108 : i32 to index
    %c0_110 = arith.constant 0 : index
    %110 = vector.load %arg2[%109, %c0_110] : memref<88x32xf32, #tpu.memory_space<vmem>>, vector<1x32xf32>
    %c27 = arith.constant 27 : index
    %c0_111 = arith.constant 0 : index
    %111 = vector.load %arg5[%c27, %c0_111] : memref<64x32xf32, #tpu.memory_space<vmem>>, vector<1x32xf32>
    tpu.vector_store %arg5[%c27, %c0_111], %110 {strides = array<i32>} : memref<64x32xf32, #tpu.memory_space<vmem>>, vector<1x32xf32>,
    %c3_112 = arith.constant 3 : index
    %c4_113 = arith.constant 4 : index
    %112 = memref.load %arg1[%c3_112, %c4_113] : memref<8x8xi32, #tpu.memory_space<smem>>
    %113 = arith.index_cast %112 : i32 to index
    %c0_114 = arith.constant 0 : index
    %114 = vector.load %arg2[%113, %c0_114] : memref<88x32xf32, #tpu.memory_space<vmem>>, vector<1x32xf32>
    %c28 = arith.constant 28 : index
    %c0_115 = arith.constant 0 : index
    %115 = vector.load %arg5[%c28, %c0_115] : memref<64x32xf32, #tpu.memory_space<vmem>>, vector<1x32xf32>
    tpu.vector_store %arg5[%c28, %c0_115], %114 {strides = array<i32>} : memref<64x32xf32, #tpu.memory_space<vmem>>, vector<1x32xf32>,
    %c3_116 = arith.constant 3 : index
    %c5_117 = arith.constant 5 : index
    %116 = memref.load %arg1[%c3_116, %c5_117] : memref<8x8xi32, #tpu.memory_space<smem>>
    %117 = arith.index_cast %116 : i32 to index
    %c0_118 = arith.constant 0 : index
    %118 = vector.load %arg2[%117, %c0_118] : memref<88x32xf32, #tpu.memory_space<vmem>>, vector<1x32xf32>
    %c29 = arith.constant 29 : index
    %c0_119 = arith.constant 0 : index
    %119 = vector.load %arg5[%c29, %c0_119] : memref<64x32xf32, #tpu.memory_space<vmem>>, vector<1x32xf32>
    tpu.vector_store %arg5[%c29, %c0_119], %118 {strides = array<i32>} : memref<64x32xf32, #tpu.memory_space<vmem>>, vector<1x32xf32>,
    %c3_120 = arith.constant 3 : index
    %c6_121 = arith.constant 6 : index
    %120 = memref.load %arg1[%c3_120, %c6_121] : memref<8x8xi32, #tpu.memory_space<smem>>
    %121 = arith.index_cast %120 : i32 to index
    %c0_122 = arith.constant 0 : index
    %122 = vector.load %arg2[%121, %c0_122] : memref<88x32xf32, #tpu.memory_space<vmem>>, vector<1x32xf32>
    %c30 = arith.constant 30 : index
    %c0_123 = arith.constant 0 : index
    %123 = vector.load %arg5[%c30, %c0_123] : memref<64x32xf32, #tpu.memory_space<vmem>>, vector<1x32xf32>
    tpu.vector_store %arg5[%c30, %c0_123], %122 {strides = array<i32>} : memref<64x32xf32, #tpu.memory_space<vmem>>, vector<1x32xf32>,
    %c3_124 = arith.constant 3 : index
    %c7_125 = arith.constant 7 : index
    %124 = memref.load %arg1[%c3_124, %c7_125] : memref<8x8xi32, #tpu.memory_space<smem>>
    %125 = arith.index_cast %124 : i32 to index
    %c0_126 = arith.constant 0 : index
    %126 = vector.load %arg2[%125, %c0_126] : memref<88x32xf32, #tpu.memory_space<vmem>>, vector<1x32xf32>
    %c31 = arith.constant 31 : index
    %c0_127 = arith.constant 0 : index
    %127 = vector.load %arg5[%c31, %c0_127] : memref<64x32xf32, #tpu.memory_space<vmem>>, vector<1x32xf32>
    tpu.vector_store %arg5[%c31, %c0_127], %126 {strides = array<i32>} : memref<64x32xf32, #tpu.memory_space<vmem>>, vector<1x32xf32>,
    %c4_128 = arith.constant 4 : index
    %c0_129 = arith.constant 0 : index
    %128 = memref.load %arg1[%c4_128, %c0_129] : memref<8x8xi32, #tpu.memory_space<smem>>
    %129 = arith.index_cast %128 : i32 to index
    %c0_130 = arith.constant 0 : index
    %130 = vector.load %arg2[%129, %c0_130] : memref<88x32xf32, #tpu.memory_space<vmem>>, vector<1x32xf32>
    %c32 = arith.constant 32 : index
    %c0_131 = arith.constant 0 : index
    %131 = vector.load %arg5[%c32, %c0_131] : memref<64x32xf32, #tpu.memory_space<vmem>>, vector<1x32xf32>
    tpu.vector_store %arg5[%c32, %c0_131], %130 {strides = array<i32>} : memref<64x32xf32, #tpu.memory_space<vmem>>, vector<1x32xf32>,
    %c4_132 = arith.constant 4 : index
    %c1_133 = arith.constant 1 : index
    %132 = memref.load %arg1[%c4_132, %c1_133] : memref<8x8xi32, #tpu.memory_space<smem>>
    %133 = arith.index_cast %132 : i32 to index
    %c0_134 = arith.constant 0 : index
    %134 = vector.load %arg2[%133, %c0_134] : memref<88x32xf32, #tpu.memory_space<vmem>>, vector<1x32xf32>
    %c33 = arith.constant 33 : index
    %c0_135 = arith.constant 0 : index
    %135 = vector.load %arg5[%c33, %c0_135] : memref<64x32xf32, #tpu.memory_space<vmem>>, vector<1x32xf32>
    tpu.vector_store %arg5[%c33, %c0_135], %134 {strides = array<i32>} : memref<64x32xf32, #tpu.memory_space<vmem>>, vector<1x32xf32>,
    %c4_136 = arith.constant 4 : index
    %c2_137 = arith.constant 2 : index
    %136 = memref.load %arg1[%c4_136, %c2_137] : memref<8x8xi32, #tpu.memory_space<smem>>
    %137 = arith.index_cast %136 : i32 to index
    %c0_138 = arith.constant 0 : index
    %138 = vector.load %arg2[%137, %c0_138] : memref<88x32xf32, #tpu.memory_space<vmem>>, vector<1x32xf32>
    %c34 = arith.constant 34 : index
    %c0_139 = arith.constant 0 : index
    %139 = vector.load %arg5[%c34, %c0_139] : memref<64x32xf32, #tpu.memory_space<vmem>>, vector<1x32xf32>
    tpu.vector_store %arg5[%c34, %c0_139], %138 {strides = array<i32>} : memref<64x32xf32, #tpu.memory_space<vmem>>, vector<1x32xf32>,
    %c4_140 = arith.constant 4 : index
    %c3_141 = arith.constant 3 : index
    %140 = memref.load %arg1[%c4_140, %c3_141] : memref<8x8xi32, #tpu.memory_space<smem>>
    %141 = arith.index_cast %140 : i32 to index
    %c0_142 = arith.constant 0 : index
    %142 = vector.load %arg2[%141, %c0_142] : memref<88x32xf32, #tpu.memory_space<vmem>>, vector<1x32xf32>
    %c35 = arith.constant 35 : index
    %c0_143 = arith.constant 0 : index
    %143 = vector.load %arg5[%c35, %c0_143] : memref<64x32xf32, #tpu.memory_space<vmem>>, vector<1x32xf32>
    tpu.vector_store %arg5[%c35, %c0_143], %142 {strides = array<i32>} : memref<64x32xf32, #tpu.memory_space<vmem>>, vector<1x32xf32>,
    %c4_144 = arith.constant 4 : index
    %c4_145 = arith.constant 4 : index
    %144 = memref.load %arg1[%c4_144, %c4_145] : memref<8x8xi32, #tpu.memory_space<smem>>
    %145 = arith.index_cast %144 : i32 to index
    %c0_146 = arith.constant 0 : index
    %146 = vector.load %arg2[%145, %c0_146] : memref<88x32xf32, #tpu.memory_space<vmem>>, vector<1x32xf32>
    %c36 = arith.constant 36 : index
    %c0_147 = arith.constant 0 : index
    %147 = vector.load %arg5[%c36, %c0_147] : memref<64x32xf32, #tpu.memory_space<vmem>>, vector<1x32xf32>
    tpu.vector_store %arg5[%c36, %c0_147], %146 {strides = array<i32>} : memref<64x32xf32, #tpu.memory_space<vmem>>, vector<1x32xf32>,
    %c4_148 = arith.constant 4 : index
    %c5_149 = arith.constant 5 : index
    %148 = memref.load %arg1[%c4_148, %c5_149] : memref<8x8xi32, #tpu.memory_space<smem>>
    %149 = arith.index_cast %148 : i32 to index
    %c0_150 = arith.constant 0 : index
    %150 = vector.load %arg2[%149, %c0_150] : memref<88x32xf32, #tpu.memory_space<vmem>>, vector<1x32xf32>
    %c37 = arith.constant 37 : index
    %c0_151 = arith.constant 0 : index
    %151 = vector.load %arg5[%c37, %c0_151] : memref<64x32xf32, #tpu.memory_space<vmem>>, vector<1x32xf32>
    tpu.vector_store %arg5[%c37, %c0_151], %150 {strides = array<i32>} : memref<64x32xf32, #tpu.memory_space<vmem>>, vector<1x32xf32>,
    %c4_152 = arith.constant 4 : index
    %c6_153 = arith.constant 6 : index
    %152 = memref.load %arg1[%c4_152, %c6_153] : memref<8x8xi32, #tpu.memory_space<smem>>
    %153 = arith.index_cast %152 : i32 to index
    %c0_154 = arith.constant 0 : index
    %154 = vector.load %arg2[%153, %c0_154] : memref<88x32xf32, #tpu.memory_space<vmem>>, vector<1x32xf32>
    %c38 = arith.constant 38 : index
    %c0_155 = arith.constant 0 : index
    %155 = vector.load %arg5[%c38, %c0_155] : memref<64x32xf32, #tpu.memory_space<vmem>>, vector<1x32xf32>
    tpu.vector_store %arg5[%c38, %c0_155], %154 {strides = array<i32>} : memref<64x32xf32, #tpu.memory_space<vmem>>, vector<1x32xf32>,
    %c4_156 = arith.constant 4 : index
    %c7_157 = arith.constant 7 : index
    %156 = memref.load %arg1[%c4_156, %c7_157] : memref<8x8xi32, #tpu.memory_space<smem>>
    %157 = arith.index_cast %156 : i32 to index
    %c0_158 = arith.constant 0 : index
    %158 = vector.load %arg2[%157, %c0_158] : memref<88x32xf32, #tpu.memory_space<vmem>>, vector<1x32xf32>
    %c39 = arith.constant 39 : index
    %c0_159 = arith.constant 0 : index
    %159 = vector.load %arg5[%c39, %c0_159] : memref<64x32xf32, #tpu.memory_space<vmem>>, vector<1x32xf32>
    tpu.vector_store %arg5[%c39, %c0_159], %158 {strides = array<i32>} : memref<64x32xf32, #tpu.memory_space<vmem>>, vector<1x32xf32>,
    %c5_160 = arith.constant 5 : index
    %c0_161 = arith.constant 0 : index
    %160 = memref.load %arg1[%c5_160, %c0_161] : memref<8x8xi32, #tpu.memory_space<smem>>
    %161 = arith.index_cast %160 : i32 to index
    %c0_162 = arith.constant 0 : index
    %162 = vector.load %arg2[%161, %c0_162] : memref<88x32xf32, #tpu.memory_space<vmem>>, vector<1x32xf32>
    %c40 = arith.constant 40 : index
    %c0_163 = arith.constant 0 : index
    %163 = vector.load %arg5[%c40, %c0_163] : memref<64x32xf32, #tpu.memory_space<vmem>>, vector<1x32xf32>
    tpu.vector_store %arg5[%c40, %c0_163], %162 {strides = array<i32>} : memref<64x32xf32, #tpu.memory_space<vmem>>, vector<1x32xf32>,
    %c5_164 = arith.constant 5 : index
    %c1_165 = arith.constant 1 : index
    %164 = memref.load %arg1[%c5_164, %c1_165] : memref<8x8xi32, #tpu.memory_space<smem>>
    %165 = arith.index_cast %164 : i32 to index
    %c0_166 = arith.constant 0 : index
    %166 = vector.load %arg2[%165, %c0_166] : memref<88x32xf32, #tpu.memory_space<vmem>>, vector<1x32xf32>
    %c41 = arith.constant 41 : index
    %c0_167 = arith.constant 0 : index
    %167 = vector.load %arg5[%c41, %c0_167] : memref<64x32xf32, #tpu.memory_space<vmem>>, vector<1x32xf32>
    tpu.vector_store %arg5[%c41, %c0_167], %166 {strides = array<i32>} : memref<64x32xf32, #tpu.memory_space<vmem>>, vector<1x32xf32>,
    %c5_168 = arith.constant 5 : index
    %c2_169 = arith.constant 2 : index
    %168 = memref.load %arg1[%c5_168, %c2_169] : memref<8x8xi32, #tpu.memory_space<smem>>
    %169 = arith.index_cast %168 : i32 to index
    %c0_170 = arith.constant 0 : index
    %170 = vector.load %arg2[%169, %c0_170] : memref<88x32xf32, #tpu.memory_space<vmem>>, vector<1x32xf32>
    %c42 = arith.constant 42 : index
    %c0_171 = arith.constant 0 : index
    %171 = vector.load %arg5[%c42, %c0_171] : memref<64x32xf32, #tpu.memory_space<vmem>>, vector<1x32xf32>
    tpu.vector_store %arg5[%c42, %c0_171], %170 {strides = array<i32>} : memref<64x32xf32, #tpu.memory_space<vmem>>, vector<1x32xf32>,
    %c5_172 = arith.constant 5 : index
    %c3_173 = arith.constant 3 : index
    %172 = memref.load %arg1[%c5_172, %c3_173] : memref<8x8xi32, #tpu.memory_space<smem>>
    %173 = arith.index_cast %172 : i32 to index
    %c0_174 = arith.constant 0 : index
    %174 = vector.load %arg2[%173, %c0_174] : memref<88x32xf32, #tpu.memory_space<vmem>>, vector<1x32xf32>
    %c43 = arith.constant 43 : index
    %c0_175 = arith.constant 0 : index
    %175 = vector.load %arg5[%c43, %c0_175] : memref<64x32xf32, #tpu.memory_space<vmem>>, vector<1x32xf32>
    tpu.vector_store %arg5[%c43, %c0_175], %174 {strides = array<i32>} : memref<64x32xf32, #tpu.memory_space<vmem>>, vector<1x32xf32>,
    %c5_176 = arith.constant 5 : index
    %c4_177 = arith.constant 4 : index
    %176 = memref.load %arg1[%c5_176, %c4_177] : memref<8x8xi32, #tpu.memory_space<smem>>
    %177 = arith.index_cast %176 : i32 to index
    %c0_178 = arith.constant 0 : index
    %178 = vector.load %arg2[%177, %c0_178] : memref<88x32xf32, #tpu.memory_space<vmem>>, vector<1x32xf32>
    %c44 = arith.constant 44 : index
    %c0_179 = arith.constant 0 : index
    %179 = vector.load %arg5[%c44, %c0_179] : memref<64x32xf32, #tpu.memory_space<vmem>>, vector<1x32xf32>
    tpu.vector_store %arg5[%c44, %c0_179], %178 {strides = array<i32>} : memref<64x32xf32, #tpu.memory_space<vmem>>, vector<1x32xf32>,
    %c5_180 = arith.constant 5 : index
    %c5_181 = arith.constant 5 : index
    %180 = memref.load %arg1[%c5_180, %c5_181] : memref<8x8xi32, #tpu.memory_space<smem>>
    %181 = arith.index_cast %180 : i32 to index
    %c0_182 = arith.constant 0 : index
    %182 = vector.load %arg2[%181, %c0_182] : memref<88x32xf32, #tpu.memory_space<vmem>>, vector<1x32xf32>
    %c45 = arith.constant 45 : index
    %c0_183 = arith.constant 0 : index
    %183 = vector.load %arg5[%c45, %c0_183] : memref<64x32xf32, #tpu.memory_space<vmem>>, vector<1x32xf32>
    tpu.vector_store %arg5[%c45, %c0_183], %182 {strides = array<i32>} : memref<64x32xf32, #tpu.memory_space<vmem>>, vector<1x32xf32>,
    %c5_184 = arith.constant 5 : index
    %c6_185 = arith.constant 6 : index
    %184 = memref.load %arg1[%c5_184, %c6_185] : memref<8x8xi32, #tpu.memory_space<smem>>
    %185 = arith.index_cast %184 : i32 to index
    %c0_186 = arith.constant 0 : index
    %186 = vector.load %arg2[%185, %c0_186] : memref<88x32xf32, #tpu.memory_space<vmem>>, vector<1x32xf32>
    %c46 = arith.constant 46 : index
    %c0_187 = arith.constant 0 : index
    %187 = vector.load %arg5[%c46, %c0_187] : memref<64x32xf32, #tpu.memory_space<vmem>>, vector<1x32xf32>
    tpu.vector_store %arg5[%c46, %c0_187], %186 {strides = array<i32>} : memref<64x32xf32, #tpu.memory_space<vmem>>, vector<1x32xf32>,
    %c5_188 = arith.constant 5 : index
    %c7_189 = arith.constant 7 : index
    %188 = memref.load %arg1[%c5_188, %c7_189] : memref<8x8xi32, #tpu.memory_space<smem>>
    %189 = arith.index_cast %188 : i32 to index
    %c0_190 = arith.constant 0 : index
    %190 = vector.load %arg2[%189, %c0_190] : memref<88x32xf32, #tpu.memory_space<vmem>>, vector<1x32xf32>
    %c47 = arith.constant 47 : index
    %c0_191 = arith.constant 0 : index
    %191 = vector.load %arg5[%c47, %c0_191] : memref<64x32xf32, #tpu.memory_space<vmem>>, vector<1x32xf32>
    tpu.vector_store %arg5[%c47, %c0_191], %190 {strides = array<i32>} : memref<64x32xf32, #tpu.memory_space<vmem>>, vector<1x32xf32>,
    %c6_192 = arith.constant 6 : index
    %c0_193 = arith.constant 0 : index
    %192 = memref.load %arg1[%c6_192, %c0_193] : memref<8x8xi32, #tpu.memory_space<smem>>
    %193 = arith.index_cast %192 : i32 to index
    %c0_194 = arith.constant 0 : index
    %194 = vector.load %arg2[%193, %c0_194] : memref<88x32xf32, #tpu.memory_space<vmem>>, vector<1x32xf32>
    %c48 = arith.constant 48 : index
    %c0_195 = arith.constant 0 : index
    %195 = vector.load %arg5[%c48, %c0_195] : memref<64x32xf32, #tpu.memory_space<vmem>>, vector<1x32xf32>
    tpu.vector_store %arg5[%c48, %c0_195], %194 {strides = array<i32>} : memref<64x32xf32, #tpu.memory_space<vmem>>, vector<1x32xf32>,
    %c6_196 = arith.constant 6 : index
    %c1_197 = arith.constant 1 : index
    %196 = memref.load %arg1[%c6_196, %c1_197] : memref<8x8xi32, #tpu.memory_space<smem>>
    %197 = arith.index_cast %196 : i32 to index
    %c0_198 = arith.constant 0 : index
    %198 = vector.load %arg2[%197, %c0_198] : memref<88x32xf32, #tpu.memory_space<vmem>>, vector<1x32xf32>
    %c49 = arith.constant 49 : index
    %c0_199 = arith.constant 0 : index
    %199 = vector.load %arg5[%c49, %c0_199] : memref<64x32xf32, #tpu.memory_space<vmem>>, vector<1x32xf32>
    tpu.vector_store %arg5[%c49, %c0_199], %198 {strides = array<i32>} : memref<64x32xf32, #tpu.memory_space<vmem>>, vector<1x32xf32>,
    %c6_200 = arith.constant 6 : index
    %c2_201 = arith.constant 2 : index
    %200 = memref.load %arg1[%c6_200, %c2_201] : memref<8x8xi32, #tpu.memory_space<smem>>
    %201 = arith.index_cast %200 : i32 to index
    %c0_202 = arith.constant 0 : index
    %202 = vector.load %arg2[%201, %c0_202] : memref<88x32xf32, #tpu.memory_space<vmem>>, vector<1x32xf32>
    %c50 = arith.constant 50 : index
    %c0_203 = arith.constant 0 : index
    %203 = vector.load %arg5[%c50, %c0_203] : memref<64x32xf32, #tpu.memory_space<vmem>>, vector<1x32xf32>
    tpu.vector_store %arg5[%c50, %c0_203], %202 {strides = array<i32>} : memref<64x32xf32, #tpu.memory_space<vmem>>, vector<1x32xf32>,
    %c6_204 = arith.constant 6 : index
    %c3_205 = arith.constant 3 : index
    %204 = memref.load %arg1[%c6_204, %c3_205] : memref<8x8xi32, #tpu.memory_space<smem>>
    %205 = arith.index_cast %204 : i32 to index
    %c0_206 = arith.constant 0 : index
    %206 = vector.load %arg2[%205, %c0_206] : memref<88x32xf32, #tpu.memory_space<vmem>>, vector<1x32xf32>
    %c51 = arith.constant 51 : index
    %c0_207 = arith.constant 0 : index
    %207 = vector.load %arg5[%c51, %c0_207] : memref<64x32xf32, #tpu.memory_space<vmem>>, vector<1x32xf32>
    tpu.vector_store %arg5[%c51, %c0_207], %206 {strides = array<i32>} : memref<64x32xf32, #tpu.memory_space<vmem>>, vector<1x32xf32>,
    %c6_208 = arith.constant 6 : index
    %c4_209 = arith.constant 4 : index
    %208 = memref.load %arg1[%c6_208, %c4_209] : memref<8x8xi32, #tpu.memory_space<smem>>
    %209 = arith.index_cast %208 : i32 to index
    %c0_210 = arith.constant 0 : index
    %210 = vector.load %arg2[%209, %c0_210] : memref<88x32xf32, #tpu.memory_space<vmem>>, vector<1x32xf32>
    %c52 = arith.constant 52 : index
    %c0_211 = arith.constant 0 : index
    %211 = vector.load %arg5[%c52, %c0_211] : memref<64x32xf32, #tpu.memory_space<vmem>>, vector<1x32xf32>
    tpu.vector_store %arg5[%c52, %c0_211], %210 {strides = array<i32>} : memref<64x32xf32, #tpu.memory_space<vmem>>, vector<1x32xf32>,
    %c6_212 = arith.constant 6 : index
    %c5_213 = arith.constant 5 : index
    %212 = memref.load %arg1[%c6_212, %c5_213] : memref<8x8xi32, #tpu.memory_space<smem>>
    %213 = arith.index_cast %212 : i32 to index
    %c0_214 = arith.constant 0 : index
    %214 = vector.load %arg2[%213, %c0_214] : memref<88x32xf32, #tpu.memory_space<vmem>>, vector<1x32xf32>
    %c53 = arith.constant 53 : index
    %c0_215 = arith.constant 0 : index
    %215 = vector.load %arg5[%c53, %c0_215] : memref<64x32xf32, #tpu.memory_space<vmem>>, vector<1x32xf32>
    tpu.vector_store %arg5[%c53, %c0_215], %214 {strides = array<i32>} : memref<64x32xf32, #tpu.memory_space<vmem>>, vector<1x32xf32>,
    %c6_216 = arith.constant 6 : index
    %c6_217 = arith.constant 6 : index
    %216 = memref.load %arg1[%c6_216, %c6_217] : memref<8x8xi32, #tpu.memory_space<smem>>
    %217 = arith.index_cast %216 : i32 to index
    %c0_218 = arith.constant 0 : index
    %218 = vector.load %arg2[%217, %c0_218] : memref<88x32xf32, #tpu.memory_space<vmem>>, vector<1x32xf32>
    %c54 = arith.constant 54 : index
    %c0_219 = arith.constant 0 : index
    %219 = vector.load %arg5[%c54, %c0_219] : memref<64x32xf32, #tpu.memory_space<vmem>>, vector<1x32xf32>
    tpu.vector_store %arg5[%c54, %c0_219], %218 {strides = array<i32>} : memref<64x32xf32, #tpu.memory_space<vmem>>, vector<1x32xf32>,
    %c6_220 = arith.constant 6 : index
    %c7_221 = arith.constant 7 : index
    %220 = memref.load %arg1[%c6_220, %c7_221] : memref<8x8xi32, #tpu.memory_space<smem>>
    %221 = arith.index_cast %220 : i32 to index
    %c0_222 = arith.constant 0 : index
    %222 = vector.load %arg2[%221, %c0_222] : memref<88x32xf32, #tpu.memory_space<vmem>>, vector<1x32xf32>
    %c55 = arith.constant 55 : index
    %c0_223 = arith.constant 0 : index
    %223 = vector.load %arg5[%c55, %c0_223] : memref<64x32xf32, #tpu.memory_space<vmem>>, vector<1x32xf32>
    tpu.vector_store %arg5[%c55, %c0_223], %222 {strides = array<i32>} : memref<64x32xf32, #tpu.memory_space<vmem>>, vector<1x32xf32>,
    %c7_224 = arith.constant 7 : index
    %c0_225 = arith.constant 0 : index
    %224 = memref.load %arg1[%c7_224, %c0_225] : memref<8x8xi32, #tpu.memory_space<smem>>
    %225 = arith.index_cast %224 : i32 to index
    %c0_226 = arith.constant 0 : index
    %226 = vector.load %arg2[%225, %c0_226] : memref<88x32xf32, #tpu.memory_space<vmem>>, vector<1x32xf32>
    %c56 = arith.constant 56 : index
    %c0_227 = arith.constant 0 : index
    %227 = vector.load %arg5[%c56, %c0_227] : memref<64x32xf32, #tpu.memory_space<vmem>>, vector<1x32xf32>
    tpu.vector_store %arg5[%c56, %c0_227], %226 {strides = array<i32>} : memref<64x32xf32, #tpu.memory_space<vmem>>, vector<1x32xf32>,
    %c7_228 = arith.constant 7 : index
    %c1_229 = arith.constant 1 : index
    %228 = memref.load %arg1[%c7_228, %c1_229] : memref<8x8xi32, #tpu.memory_space<smem>>
    %229 = arith.index_cast %228 : i32 to index
    %c0_230 = arith.constant 0 : index
    %230 = vector.load %arg2[%229, %c0_230] : memref<88x32xf32, #tpu.memory_space<vmem>>, vector<1x32xf32>
    %c57 = arith.constant 57 : index
    %c0_231 = arith.constant 0 : index
    %231 = vector.load %arg5[%c57, %c0_231] : memref<64x32xf32, #tpu.memory_space<vmem>>, vector<1x32xf32>
    tpu.vector_store %arg5[%c57, %c0_231], %230 {strides = array<i32>} : memref<64x32xf32, #tpu.memory_space<vmem>>, vector<1x32xf32>,
    %c7_232 = arith.constant 7 : index
    %c2_233 = arith.constant 2 : index
    %232 = memref.load %arg1[%c7_232, %c2_233] : memref<8x8xi32, #tpu.memory_space<smem>>
    %233 = arith.index_cast %232 : i32 to index
    %c0_234 = arith.constant 0 : index
    %234 = vector.load %arg2[%233, %c0_234] : memref<88x32xf32, #tpu.memory_space<vmem>>, vector<1x32xf32>
    %c58 = arith.constant 58 : index
    %c0_235 = arith.constant 0 : index
    %235 = vector.load %arg5[%c58, %c0_235] : memref<64x32xf32, #tpu.memory_space<vmem>>, vector<1x32xf32>
    tpu.vector_store %arg5[%c58, %c0_235], %234 {strides = array<i32>} : memref<64x32xf32, #tpu.memory_space<vmem>>, vector<1x32xf32>,
    %c7_236 = arith.constant 7 : index
    %c3_237 = arith.constant 3 : index
    %236 = memref.load %arg1[%c7_236, %c3_237] : memref<8x8xi32, #tpu.memory_space<smem>>
    %237 = arith.index_cast %236 : i32 to index
    %c0_238 = arith.constant 0 : index
    %238 = vector.load %arg2[%237, %c0_238] : memref<88x32xf32, #tpu.memory_space<vmem>>, vector<1x32xf32>
    %c59 = arith.constant 59 : index
    %c0_239 = arith.constant 0 : index
    %239 = vector.load %arg5[%c59, %c0_239] : memref<64x32xf32, #tpu.memory_space<vmem>>, vector<1x32xf32>
    tpu.vector_store %arg5[%c59, %c0_239], %238 {strides = array<i32>} : memref<64x32xf32, #tpu.memory_space<vmem>>, vector<1x32xf32>,
    %c7_240 = arith.constant 7 : index
    %c4_241 = arith.constant 4 : index
    %240 = memref.load %arg1[%c7_240, %c4_241] : memref<8x8xi32, #tpu.memory_space<smem>>
    %241 = arith.index_cast %240 : i32 to index
    %c0_242 = arith.constant 0 : index
    %242 = vector.load %arg2[%241, %c0_242] : memref<88x32xf32, #tpu.memory_space<vmem>>, vector<1x32xf32>
    %c60 = arith.constant 60 : index
    %c0_243 = arith.constant 0 : index
    %243 = vector.load %arg5[%c60, %c0_243] : memref<64x32xf32, #tpu.memory_space<vmem>>, vector<1x32xf32>
    tpu.vector_store %arg5[%c60, %c0_243], %242 {strides = array<i32>} : memref<64x32xf32, #tpu.memory_space<vmem>>, vector<1x32xf32>,
    %c7_244 = arith.constant 7 : index
    %c5_245 = arith.constant 5 : index
    %244 = memref.load %arg1[%c7_244, %c5_245] : memref<8x8xi32, #tpu.memory_space<smem>>
    %245 = arith.index_cast %244 : i32 to index
    %c0_246 = arith.constant 0 : index
    %246 = vector.load %arg2[%245, %c0_246] : memref<88x32xf32, #tpu.memory_space<vmem>>, vector<1x32xf32>
    %c61 = arith.constant 61 : index
    %c0_247 = arith.constant 0 : index
    %247 = vector.load %arg5[%c61, %c0_247] : memref<64x32xf32, #tpu.memory_space<vmem>>, vector<1x32xf32>
    tpu.vector_store %arg5[%c61, %c0_247], %246 {strides = array<i32>} : memref<64x32xf32, #tpu.memory_space<vmem>>, vector<1x32xf32>,
    %c7_248 = arith.constant 7 : index
    %c6_249 = arith.constant 6 : index
    %248 = memref.load %arg1[%c7_248, %c6_249] : memref<8x8xi32, #tpu.memory_space<smem>>
    %249 = arith.index_cast %248 : i32 to index
    %c0_250 = arith.constant 0 : index
    %250 = vector.load %arg2[%249, %c0_250] : memref<88x32xf32, #tpu.memory_space<vmem>>, vector<1x32xf32>
    %c62 = arith.constant 62 : index
    %c0_251 = arith.constant 0 : index
    %251 = vector.load %arg5[%c62, %c0_251] : memref<64x32xf32, #tpu.memory_space<vmem>>, vector<1x32xf32>
    tpu.vector_store %arg5[%c62, %c0_251], %250 {strides = array<i32>} : memref<64x32xf32, #tpu.memory_space<vmem>>, vector<1x32xf32>,
    %c7_252 = arith.constant 7 : index
    %c7_253 = arith.constant 7 : index
    %252 = memref.load %arg1[%c7_252, %c7_253] : memref<8x8xi32, #tpu.memory_space<smem>>
    %253 = arith.index_cast %252 : i32 to index
    %c0_254 = arith.constant 0 : index
    %254 = vector.load %arg2[%253, %c0_254] : memref<88x32xf32, #tpu.memory_space<vmem>>, vector<1x32xf32>
    %c63 = arith.constant 63 : index
    %c0_255 = arith.constant 0 : index
    %255 = vector.load %arg5[%c63, %c0_255] : memref<64x32xf32, #tpu.memory_space<vmem>>, vector<1x32xf32>
    tpu.vector_store %arg5[%c63, %c0_255], %254 {strides = array<i32>} : memref<64x32xf32, #tpu.memory_space<vmem>>, vector<1x32xf32>,
    %c56_256 = arith.constant 56 : index
    %c0_257 = arith.constant 0 : index
    %256 = vector.load %arg2[%c56_256, %c0_257] : memref<88x32xf32, #tpu.memory_space<vmem>>, vector<32x32xf32>
    %c0_258 = arith.constant 0 : index
    %c0_259 = arith.constant 0 : index
    %257 = vector.load %arg5[%c0_258, %c0_259] : memref<64x32xf32, #tpu.memory_space<vmem>>, vector<8x32xf32>
    %258 = math.tanh %257 : vector<8x32xf32>
    %c8_260 = arith.constant 8 : index
    %c0_261 = arith.constant 0 : index
    %259 = vector.load %arg5[%c8_260, %c0_261] : memref<64x32xf32, #tpu.memory_space<vmem>>, vector<8x32xf32>
    %cst = arith.constant dense<0.000000e+00> : vector<8x32xf32>
    %260 = tpu.matmul %258, %256, %cst {dimension_numbers = #tpu.dot_dimension_numbers<[1], [0], [0], [1], [0, 0, 1, 1], [], []>} : vector<8x32xf32>, vector<32x32xf32>, vector<8x32xf32> -> vector<8x32xf32>
    %261 = arith.addf %259, %260 : vector<8x32xf32>
    %262 = math.tanh %261 : vector<8x32xf32>
    %c16_262 = arith.constant 16 : index
    %c0_263 = arith.constant 0 : index
    %263 = vector.load %arg5[%c16_262, %c0_263] : memref<64x32xf32, #tpu.memory_space<vmem>>, vector<8x32xf32>
    %cst_264 = arith.constant dense<0.000000e+00> : vector<8x32xf32>
    %264 = tpu.matmul %262, %256, %cst_264 {dimension_numbers = #tpu.dot_dimension_numbers<[1], [0], [0], [1], [0, 0, 1, 1], [], []>} : vector<8x32xf32>, vector<32x32xf32>, vector<8x32xf32> -> vector<8x32xf32>
    %265 = arith.addf %263, %264 : vector<8x32xf32>
    %266 = math.tanh %265 : vector<8x32xf32>
    %c24_265 = arith.constant 24 : index
    %c0_266 = arith.constant 0 : index
    %267 = vector.load %arg5[%c24_265, %c0_266] : memref<64x32xf32, #tpu.memory_space<vmem>>, vector<8x32xf32>
    %cst_267 = arith.constant dense<0.000000e+00> : vector<8x32xf32>
    %268 = tpu.matmul %266, %256, %cst_267 {dimension_numbers = #tpu.dot_dimension_numbers<[1], [0], [0], [1], [0, 0, 1, 1], [], []>} : vector<8x32xf32>, vector<32x32xf32>, vector<8x32xf32> -> vector<8x32xf32>
    %269 = arith.addf %267, %268 : vector<8x32xf32>
    %270 = math.tanh %269 : vector<8x32xf32>
    %c32_268 = arith.constant 32 : index
    %c0_269 = arith.constant 0 : index
    %271 = vector.load %arg5[%c32_268, %c0_269] : memref<64x32xf32, #tpu.memory_space<vmem>>, vector<8x32xf32>
    %cst_270 = arith.constant dense<0.000000e+00> : vector<8x32xf32>
    %272 = tpu.matmul %270, %256, %cst_270 {dimension_numbers = #tpu.dot_dimension_numbers<[1], [0], [0], [1], [0, 0, 1, 1], [], []>} : vector<8x32xf32>, vector<32x32xf32>, vector<8x32xf32> -> vector<8x32xf32>
    %273 = arith.addf %271, %272 : vector<8x32xf32>
    %274 = math.tanh %273 : vector<8x32xf32>
    %c40_271 = arith.constant 40 : index
    %c0_272 = arith.constant 0 : index
    %275 = vector.load %arg5[%c40_271, %c0_272] : memref<64x32xf32, #tpu.memory_space<vmem>>, vector<8x32xf32>
    %cst_273 = arith.constant dense<0.000000e+00> : vector<8x32xf32>
    %276 = tpu.matmul %274, %256, %cst_273 {dimension_numbers = #tpu.dot_dimension_numbers<[1], [0], [0], [1], [0, 0, 1, 1], [], []>} : vector<8x32xf32>, vector<32x32xf32>, vector<8x32xf32> -> vector<8x32xf32>
    %277 = arith.addf %275, %276 : vector<8x32xf32>
    %278 = math.tanh %277 : vector<8x32xf32>
    %c48_274 = arith.constant 48 : index
    %c0_275 = arith.constant 0 : index
    %279 = vector.load %arg5[%c48_274, %c0_275] : memref<64x32xf32, #tpu.memory_space<vmem>>, vector<8x32xf32>
    %cst_276 = arith.constant dense<0.000000e+00> : vector<8x32xf32>
    %280 = tpu.matmul %278, %256, %cst_276 {dimension_numbers = #tpu.dot_dimension_numbers<[1], [0], [0], [1], [0, 0, 1, 1], [], []>} : vector<8x32xf32>, vector<32x32xf32>, vector<8x32xf32> -> vector<8x32xf32>
    %281 = arith.addf %279, %280 : vector<8x32xf32>
    %282 = math.tanh %281 : vector<8x32xf32>
    %c56_277 = arith.constant 56 : index
    %c0_278 = arith.constant 0 : index
    %283 = vector.load %arg5[%c56_277, %c0_278] : memref<64x32xf32, #tpu.memory_space<vmem>>, vector<8x32xf32>
    %cst_279 = arith.constant dense<0.000000e+00> : vector<8x32xf32>
    %284 = tpu.matmul %282, %256, %cst_279 {dimension_numbers = #tpu.dot_dimension_numbers<[1], [0], [0], [1], [0, 0, 1, 1], [], []>} : vector<8x32xf32>, vector<32x32xf32>, vector<8x32xf32> -> vector<8x32xf32>
    %285 = arith.addf %283, %284 : vector<8x32xf32>
    %286 = math.tanh %285 : vector<8x32xf32>
    %c0_280 = arith.constant 0 : index
    %c0_281 = arith.constant 0 : index
    %287 = vector.load %arg3[%c0_280, %c0_281] : memref<33x128xf32, #tpu.memory_space<vmem>>, vector<32x128xf32>
    %c32_282 = arith.constant 32 : index
    %c0_283 = arith.constant 0 : index
    %288 = vector.load %arg3[%c32_282, %c0_283] : memref<33x128xf32, #tpu.memory_space<vmem>>, vector<1x128xf32>
    %cst_284 = arith.constant dense<0.000000e+00> : vector<8x128xf32>
    %289 = tpu.matmul %286, %287, %cst_284 {dimension_numbers = #tpu.dot_dimension_numbers<[1], [0], [0], [1], [0, 0, 1, 1], [], []>} : vector<8x32xf32>, vector<32x128xf32>, vector<8x128xf32> -> vector<8x128xf32>
    %290 = vector.broadcast %288 : vector<1x128xf32> to vector<8x128xf32>
    %291 = arith.addf %289, %290 : vector<8x128xf32>
    %c0_285 = arith.constant 0 : index
    %c0_286 = arith.constant 0 : index
    %292 = vector.load %arg4[%c0_285, %c0_286] : memref<8x128xf32, #tpu.memory_space<vmem>>, vector<8x128xf32>
    tpu.vector_store %arg4[%c0_285, %c0_286], %291 {strides = array<i32>} : memref<8x128xf32, #tpu.memory_space<vmem>>, vector<8x128xf32>,
    return
  }
  func.func @transform_0(%arg0: i32, %arg1: memref<8x8xi32, #tpu.memory_space<smem>>) -> (i32, i32) {
    %c0_i32 = arith.constant 0 : i32
    %c0_i32_0 = arith.constant 0 : i32
    %c0_i32_1 = arith.constant 0 : i32
    return %c0_i32, %c0_i32_0 : i32, i32
  }
  func.func @transform_1(%arg0: i32, %arg1: memref<8x8xi32, #tpu.memory_space<smem>>) -> (i32, i32) {
    %c0_i32 = arith.constant 0 : i32
    %c0_i32_0 = arith.constant 0 : i32
    %c0_i32_1 = arith.constant 0 : i32
    return %c0_i32, %c0_i32_0 : i32, i32
  }
  func.func @transform_2(%arg0: i32, %arg1: memref<8x8xi32, #tpu.memory_space<smem>>) -> (i32, i32) {
    %c0_i32 = arith.constant 0 : i32
    %c0_i32_0 = arith.constant 0 : i32
    %c0_i32_1 = arith.constant 0 : i32
    return %c0_i32, %c0_i32_0 : i32, i32
  }
}

</mosaic_0001>

<llo_original>
// kernel: tpu_custom_call.1
$region0: #{tpu_custom_call.1}
  #allocation0 [shape = 'u32[]', space=smem, size = 0x4, offset = 0x4, fixed_abs, tag = 'smem constant byte address 0x4 - core index']
  #allocation1 [shape = 'u32[144,128]{1,0:T(1,128)}', space=vmem, size = 0x12000, scoped, tag = 'internal scratch']
  #allocation2 [shape = 'f32[64,32]{1,0:T(8,128)}', space=vmem, size = 0x8000, scoped, tag = 'scratch operand']
  #allocation3 [shape = 's32[1]{0}', space=sflag, size = 0x4, scoped, tag = 'scoped memory for tpu_custom_call.1']
  #allocation4 [shape = 'u8[4096]{0}', space=smem, size = 0x1000, scoped, tag = 'prefetched SMEM operand 0']
  %s0 = inlined_call_operand.vmem [shape: s32[8,8], index: 0, kind: input, shape index: {}]
  %s1 = inlined_call_operand.vmem [shape: f32[88,32], index: 1, kind: input, shape index: {}]
  %s2 = inlined_call_operand.vmem [shape: f32[33,128], index: 2, kind: input, shape index: {}]
  %s3 = inlined_call_operand.hbm [shape: f32[8,128], index: 3, kind: output, shape index: {}]
  %s4 = sld [smem:[#allocation0]]
  $region18: #{tpu_custom_call.1} parent=0
    _
  %s6 = ssub.s32 1, %s4
  %s7 = scalar_select 0, %s6, %s4
  %s8 = sshll.u32 %s0, 4
  %s9 = int_to_ptr.vmem [resolvable:$true] %s8
  %11 = dma.vmem_to_smem %s9, 128, [#allocation4], [#allocation3]
  %12 = dma.done [#allocation3], 128
  %13 = sfence
  $region1: #{tpu_custom_call.1} parent=0
    #allocation5 [shape = 'u8[4096]{0}', space=vmem, size = 0x1000, scoped, tag = 'output window, operand 0, single buffered']
    #allocation6 [shape = 's32[1]{0}', space=sflag, size = 0x4, scoped, tag = 'scoped memory for tpu_custom_call.1']
    %14 = vsyncpa [#allocation6], 0
    // Predicated region
    $region2: #{tpu_custom_call.1} parent=1 // pred_check
      _
    $region3: #{tpu_custom_call.1} parent=1 // pred_check_branch
      %16 = sbr.rel (0) target = $region5
    $region4: #{tpu_custom_call.1} parent=1 // pred_region
      _
    $region5: #{tpu_custom_call.1} parent=1 // pred_fallthru
      _
    // Predicated region
    $region6: #{tpu_custom_call.1} parent=1 // pred_check
      _
    $region7: #{tpu_custom_call.1} parent=1 // pred_check_branch
      %18 = sbr.rel (0) target = $region9
    $region8: #{tpu_custom_call.1} parent=1 // pred_region
      _
    $region9: #{tpu_custom_call.1} parent=1 // pred_fallthru
      _
    %s19 = sld [smem:[#allocation4]]
    %s20 = scalar_lea.vmem %s1, %s19
    %v21 = vld [vmem:[%s20] sm:$0x1]
    %vm22 = vcmask 253952
    %23 = vst.msk [vmem:[#allocation2] sm:$0x1] %vm22, %v21
    %s24 = sld [smem:[#allocation4 + $0x1]]
    %s25 = scalar_lea.vmem %s1, %s24
    %v26 = vld [vmem:[%s25] sm:$0x1]
    %27 = vst.msk [vmem:[#allocation2 + $0x1] sm:$0x1] %vm22, %v26
    %s28 = sld [smem:[#allocation4 + $0x2]]
    %s29 = scalar_lea.vmem %s1, %s28
    %v30 = vld [vmem:[%s29] sm:$0x1]
    %31 = vst.msk [vmem:[#allocation2 + $0x2] sm:$0x1] %vm22, %v30
    %s32 = sld [smem:[#allocation4 + $0x3]]
    %s33 = scalar_lea.vmem %s1, %s32
    %v34 = vld [vmem:[%s33] sm:$0x1]
    %35 = vst.msk [vmem:[#allocation2 + $0x3] sm:$0x1] %vm22, %v34
    %s36 = sld [smem:[#allocation4 + $0x4]]
    %s37 = scalar_lea.vmem %s1, %s36
    %v38 = vld [vmem:[%s37] sm:$0x1]
    %39 = vst.msk [vmem:[#allocation2 + $0x4] sm:$0x1] %vm22, %v38
    %s40 = sld [smem:[#allocation4 + $0x5]]
    %s41 = scalar_lea.vmem %s1, %s40
    %v42 = vld [vmem:[%s41] sm:$0x1]
    %43 = vst.msk [vmem:[#allocation2 + $0x5] sm:$0x1] %vm22, %v42
    %s44 = sld [smem:[#allocation4 + $0x6]]
    %s45 = scalar_lea.vmem %s1, %s44
    %v46 = vld [vmem:[%s45] sm:$0x1]
    %47 = vst.msk [vmem:[#allocation2 + $0x6] sm:$0x1] %vm22, %v46
    %s48 = sld [smem:[#allocation4 + $0x7]]
    %s49 = scalar_lea.vmem %s1, %s48
    %v50 = vld [vmem:[%s49] sm:$0x1]
    %51 = vst.msk [vmem:[#allocation2 + $0x7] sm:$0x1] %vm22, %v50
    %s52 = sld [smem:[#allocation4 + $0x80]]
    %s53 = scalar_lea.vmem %s1, %s52
    %v54 = vld [vmem:[%s53] sm:$0x1]
    %55 = vst.msk [vmem:[#allocation2 + $0x8] sm:$0x1] %vm22, %v54
    %s56 = sld [smem:[#allocation4 + $0x81]]
    %s57 = scalar_lea.vmem %s1, %s56
    %v58 = vld [vmem:[%s57] sm:$0x1]
    %59 = vst.msk [vmem:[#allocation2 + $0x9] sm:$0x1] %vm22, %v58
    %s60 = sld [smem:[#allocation4 + $0x82]]
    %s61 = scalar_lea.vmem %s1, %s60
    %v62 = vld [vmem:[%s61] sm:$0x1]
    %63 = vst.msk [vmem:[#allocation2 + $0xa] sm:$0x1] %vm22, %v62
    %s64 = sld [smem:[#allocation4 + $0x83]]
    %s65 = scalar_lea.vmem %s1, %s64
    %v66 = vld [vmem:[%s65] sm:$0x1]
    %67 = vst.msk [vmem:[#allocation2 + $0xb] sm:$0x1] %vm22, %v66
    %s68 = sld [smem:[#allocation4 + $0x84]]
    %s69 = scalar_lea.vmem %s1, %s68
    %v70 = vld [vmem:[%s69] sm:$0x1]
    %71 = vst.msk [vmem:[#allocation2 + $0xc] sm:$0x1] %vm22, %v70
    %s72 = sld [smem:[#allocation4 + $0x85]]
    %s73 = scalar_lea.vmem %s1, %s72
    %v74 = vld [vmem:[%s73] sm:$0x1]
    %75 = vst.msk [vmem:[#allocation2 + $0xd] sm:$0x1] %vm22, %v74
    %s76 = sld [smem:[#allocation4 + $0x86]]
    %s77 = scalar_lea.vmem %s1, %s76
    %v78 = vld [vmem:[%s77] sm:$0x1]
    %79 = vst.msk [vmem:[#allocation2 + $0xe] sm:$0x1] %vm22, %v78
    %s80 = sld [smem:[#allocation4 + $0x87]]
    %s81 = scalar_lea.vmem %s1, %s80
    %v82 = vld [vmem:[%s81] sm:$0x1]
    %83 = vst.msk [vmem:[#allocation2 + $0xf] sm:$0x1] %vm22, %v82
    %s84 = sld [smem:[#allocation4 + $0x100]]
    %s85 = scalar_lea.vmem %s1, %s84
    %v86 = vld [vmem:[%s85] sm:$0x1]
    %87 = vst.msk [vmem:[#allocation2 + $0x10] sm:$0x1] %vm22, %v86
    %s88 = sld [smem:[#allocation4 + $0x101]]
    %s89 = scalar_lea.vmem %s1, %s88
    %v90 = vld [vmem:[%s89] sm:$0x1]
    %91 = vst.msk [vmem:[#allocation2 + $0x11] sm:$0x1] %vm22, %v90
    %s92 = sld [smem:[#allocation4 + $0x102]]
    %s93 = scalar_lea.vmem %s1, %s92
    %v94 = vld [vmem:[%s93] sm:$0x1]
    %95 = vst.msk [vmem:[#allocation2 + $0x12] sm:$0x1] %vm22, %v94
    %s96 = sld [smem:[#allocation4 + $0x103]]
    %s97 = scalar_lea.vmem %s1, %s96
    %v98 = vld [vmem:[%s97] sm:$0x1]
    %99 = vst.msk [vmem:[#allocation2 + $0x13] sm:$0x1] %vm22, %v98
    %s100 = sld [smem:[#allocation4 + $0x104]]
    %s101 = scalar_lea.vmem %s1, %s100
    %v102 = vld [vmem:[%s101] sm:$0x1]
    %103 = vst.msk [vmem:[#allocation2 + $0x14] sm:$0x1] %vm22, %v102
    %s104 = sld [smem:[#allocation4 + $0x105]]
    %s105 = scalar_lea.vmem %s1, %s104
    %v106 = vld [vmem:[%s105] sm:$0x1]
    %107 = vst.msk [vmem:[#allocation2 + $0x15] sm:$0x1] %vm22, %v106
    %s108 = sld [smem:[#allocation4 + $0x106]]
    %s109 = scalar_lea.vmem %s1, %s108
    %v110 = vld [vmem:[%s109] sm:$0x1]
    %111 = vst.msk [vmem:[#allocation2 + $0x16] sm:$0x1] %vm22, %v110
    %s112 = sld [smem:[#allocation4 + $0x107]]
    %s113 = scalar_lea.vmem %s1, %s112
    %v114 = vld [vmem:[%s113] sm:$0x1]
    %115 = vst.msk [vmem:[#allocation2 + $0x17] sm:$0x1] %vm22, %v114
    %s116 = sld [smem:[#allocation4 + $0x180]]
    %s117 = scalar_lea.vmem %s1, %s116
    %v118 = vld [vmem:[%s117] sm:$0x1]
    %119 = vst.msk [vmem:[#allocation2 + $0x18] sm:$0x1] %vm22, %v118
    %s120 = sld [smem:[#allocation4 + $0x181]]
    %s121 = scalar_lea.vmem %s1, %s120
    %v122 = vld [vmem:[%s121] sm:$0x1]
    %123 = vst.msk [vmem:[#allocation2 + $0x19] sm:$0x1] %vm22, %v122
    %s124 = sld [smem:[#allocation4 + $0x182]]
    %s125 = scalar_lea.vmem %s1, %s124
    %v126 = vld [vmem:[%s125] sm:$0x1]
    %127 = vst.msk [vmem:[#allocation2 + $0x1a] sm:$0x1] %vm22, %v126
    %s128 = sld [smem:[#allocation4 + $0x183]]
    %s129 = scalar_lea.vmem %s1, %s128
    %v130 = vld [vmem:[%s129] sm:$0x1]
    %131 = vst.msk [vmem:[#allocation2 + $0x1b] sm:$0x1] %vm22, %v130
    %s132 = sld [smem:[#allocation4 + $0x184]]
    %s133 = scalar_lea.vmem %s1, %s132
    %v134 = vld [vmem:[%s133] sm:$0x1]
    %135 = vst.msk [vmem:[#allocation2 + $0x1c] sm:$0x1] %vm22, %v134
    %s136 = sld [smem:[#allocation4 + $0x185]]
    %s137 = scalar_lea.vmem %s1, %s136
    %v138 = vld [vmem:[%s137] sm:$0x1]
    %139 = vst.msk [vmem:[#allocation2 + $0x1d] sm:$0x1] %vm22, %v138
    %s140 = sld [smem:[#allocation4 + $0x186]]
    %s141 = scalar_lea.vmem %s1, %s140
    %v142 = vld [vmem:[%s141] sm:$0x1]
    %143 = vst.msk [vmem:[#allocation2 + $0x1e] sm:$0x1] %vm22, %v142
    %s144 = sld [smem:[#allocation4 + $0x187]]
    %s145 = scalar_lea.vmem %s1, %s144
    %v146 = vld [vmem:[%s145] sm:$0x1]
    %147 = vst.msk [vmem:[#allocation2 + $0x1f] sm:$0x1] %vm22, %v146
    %s148 = sld [smem:[#allocation4 + $0x200]]
    %s149 = scalar_lea.vmem %s1, %s148
    %v150 = vld [vmem:[%s149] sm:$0x1]
    %151 = vst.msk [vmem:[#allocation2 + $0x20] sm:$0x1] %vm22, %v150
    %s152 = sld [smem:[#allocation4 + $0x201]]
    %s153 = scalar_lea.vmem %s1, %s152
    %v154 = vld [vmem:[%s153] sm:$0x1]
    %155 = vst.msk [vmem:[#allocation2 + $0x21] sm:$0x1] %vm22, %v154
    %s156 = sld [smem:[#allocation4 + $0x202]]
    %s157 = scalar_lea.vmem %s1, %s156
    %v158 = vld [vmem:[%s157] sm:$0x1]
    %159 = vst.msk [vmem:[#allocation2 + $0x22] sm:$0x1] %vm22, %v158
    %s160 = sld [smem:[#allocation4 + $0x203]]
    %s161 = scalar_lea.vmem %s1, %s160
    %v162 = vld [vmem:[%s161] sm:$0x1]
    %163 = vst.msk [vmem:[#allocation2 + $0x23] sm:$0x1] %vm22, %v162
    %s164 = sld [smem:[#allocation4 + $0x204]]
    %s165 = scalar_lea.vmem %s1, %s164
    %v166 = vld [vmem:[%s165] sm:$0x1]
    %167 = vst.msk [vmem:[#allocation2 + $0x24] sm:$0x1] %vm22, %v166
    %s168 = sld [smem:[#allocation4 + $0x205]]
    %s169 = scalar_lea.vmem %s1, %s168
    %v170 = vld [vmem:[%s169] sm:$0x1]
    %171 = vst.msk [vmem:[#allocation2 + $0x25] sm:$0x1] %vm22, %v170
    %s172 = sld [smem:[#allocation4 + $0x206]]
    %s173 = scalar_lea.vmem %s1, %s172
    %v174 = vld [vmem:[%s173] sm:$0x1]
    %175 = vst.msk [vmem:[#allocation2 + $0x26] sm:$0x1] %vm22, %v174
    %s176 = sld [smem:[#allocation4 + $0x207]]
    %s177 = scalar_lea.vmem %s1, %s176
    %v178 = vld [vmem:[%s177] sm:$0x1]
    %179 = vst.msk [vmem:[#allocation2 + $0x27] sm:$0x1] %vm22, %v178
    %s180 = sld [smem:[#allocation4 + $0x280]]
    %s181 = scalar_lea.vmem %s1, %s180
    %v182 = vld [vmem:[%s181] sm:$0x1]
    %183 = vst.msk [vmem:[#allocation2 + $0x28] sm:$0x1] %vm22, %v182
    %s184 = sld [smem:[#allocation4 + $0x281]]
    %s185 = scalar_lea.vmem %s1, %s184
    %v186 = vld [vmem:[%s185] sm:$0x1]
    %187 = vst.msk [vmem:[#allocation2 + $0x29] sm:$0x1] %vm22, %v186
    %s188 = sld [smem:[#allocation4 + $0x282]]
    %s189 = scalar_lea.vmem %s1, %s188
    %v190 = vld [vmem:[%s189] sm:$0x1]
    %191 = vst.msk [vmem:[#allocation2 + $0x2a] sm:$0x1] %vm22, %v190
    %s192 = sld [smem:[#allocation4 + $0x283]]
    %s193 = scalar_lea.vmem %s1, %s192
    %v194 = vld [vmem:[%s193] sm:$0x1]
    %195 = vst.msk [vmem:[#allocation2 + $0x2b] sm:$0x1] %vm22, %v194
    %s196 = sld [smem:[#allocation4 + $0x284]]
    %s197 = scalar_lea.vmem %s1, %s196
    %v198 = vld [vmem:[%s197] sm:$0x1]
    %199 = vst.msk [vmem:[#allocation2 + $0x2c] sm:$0x1] %vm22, %v198
    %s200 = sld [smem:[#allocation4 + $0x285]]
    %s201 = scalar_lea.vmem %s1, %s200
    %v202 = vld [vmem:[%s201] sm:$0x1]
    %203 = vst.msk [vmem:[#allocation2 + $0x2d] sm:$0x1] %vm22, %v202
    %s204 = sld [smem:[#allocation4 + $0x286]]
    %s205 = scalar_lea.vmem %s1, %s204
    %v206 = vld [vmem:[%s205] sm:$0x1]
    %207 = vst.msk [vmem:[#allocation2 + $0x2e] sm:$0x1] %vm22, %v206
    %s208 = sld [smem:[#allocation4 + $0x287]]
    %s209 = scalar_lea.vmem %s1, %s208
    %v210 = vld [vmem:[%s209] sm:$0x1]
    %211 = vst.msk [vmem:[#allocation2 + $0x2f] sm:$0x1] %vm22, %v210
    %s212 = sld [smem:[#allocation4 + $0x300]]
    %s213 = scalar_lea.vmem %s1, %s212
    %v214 = vld [vmem:[%s213] sm:$0x1]
    %215 = vst.msk [vmem:[#allocation2 + $0x30] sm:$0x1] %vm22, %v214
    %s216 = sld [smem:[#allocation4 + $0x301]]
    %s217 = scalar_lea.vmem %s1, %s216
    %v218 = vld [vmem:[%s217] sm:$0x1]
    %219 = vst.msk [vmem:[#allocation2 + $0x31] sm:$0x1] %vm22, %v218
    %s220 = sld [smem:[#allocation4 + $0x302]]
    %s221 = scalar_lea.vmem %s1, %s220
    %v222 = vld [vmem:[%s221] sm:$0x1]
    %223 = vst.msk [vmem:[#allocation2 + $0x32] sm:$0x1] %vm22, %v222
    %s224 = sld [smem:[#allocation4 + $0x303]]
    %s225 = scalar_lea.vmem %s1, %s224
    %v226 = vld [vmem:[%s225] sm:$0x1]
    %227 = vst.msk [vmem:[#allocation2 + $0x33] sm:$0x1] %vm22, %v226
    %s228 = sld [smem:[#allocation4 + $0x304]]
    %s229 = scalar_lea.vmem %s1, %s228
    %v230 = vld [vmem:[%s229] sm:$0x1]
    %231 = vst.msk [vmem:[#allocation2 + $0x34] sm:$0x1] %vm22, %v230
    %s232 = sld [smem:[#allocation4 + $0x305]]
    %s233 = scalar_lea.vmem %s1, %s232
    %v234 = vld [vmem:[%s233] sm:$0x1]
    %235 = vst.msk [vmem:[#allocation2 + $0x35] sm:$0x1] %vm22, %v234
    %s236 = sld [smem:[#allocation4 + $0x306]]
    %s237 = scalar_lea.vmem %s1, %s236
    %v238 = vld [vmem:[%s237] sm:$0x1]
    %239 = vst.msk [vmem:[#allocation2 + $0x36] sm:$0x1] %vm22, %v238
    %s240 = sld [smem:[#allocation4 + $0x307]]
    %s241 = scalar_lea.vmem %s1, %s240
    %v242 = vld [vmem:[%s241] sm:$0x1]
    %243 = vst.msk [vmem:[#allocation2 + $0x37] sm:$0x1] %vm22, %v242
    %s244 = sld [smem:[#allocation4 + $0x380]]
    %s245 = scalar_lea.vmem %s1, %s244
    %v246 = vld [vmem:[%s245] sm:$0x1]
    %247 = vst.msk [vmem:[#allocation2 + $0x38] sm:$0x1] %vm22, %v246
    %s248 = sld [smem:[#allocation4 + $0x381]]
    %s249 = scalar_lea.vmem %s1, %s248
    %v250 = vld [vmem:[%s249] sm:$0x1]
    %251 = vst.msk [vmem:[#allocation2 + $0x39] sm:$0x1] %vm22, %v250
    %s252 = sld [smem:[#allocation4 + $0x382]]
    %s253 = scalar_lea.vmem %s1, %s252
    %v254 = vld [vmem:[%s253] sm:$0x1]
    %255 = vst.msk [vmem:[#allocation2 + $0x3a] sm:$0x1] %vm22, %v254
    %s256 = sld [smem:[#allocation4 + $0x383]]
    %s257 = scalar_lea.vmem %s1, %s256
    %v258 = vld [vmem:[%s257] sm:$0x1]
    %259 = vst.msk [vmem:[#allocation2 + $0x3b] sm:$0x1] %vm22, %v258
    %s260 = sld [smem:[#allocation4 + $0x384]]
    %s261 = scalar_lea.vmem %s1, %s260
    %v262 = vld [vmem:[%s261] sm:$0x1]
    %263 = vst.msk [vmem:[#allocation2 + $0x3c] sm:$0x1] %vm22, %v262
    %s264 = sld [smem:[#allocation4 + $0x385]]
    %s265 = scalar_lea.vmem %s1, %s264
    %v266 = vld [vmem:[%s265] sm:$0x1]
    %267 = vst.msk [vmem:[#allocation2 + $0x3d] sm:$0x1] %vm22, %v266
    %s268 = sld [smem:[#allocation4 + $0x386]]
    %s269 = scalar_lea.vmem %s1, %s268
    %v270 = vld [vmem:[%s269] sm:$0x1]
    %271 = vst.msk [vmem:[#allocation2 + $0x3e] sm:$0x1] %vm22, %v270
    %s272 = sld [smem:[#allocation4 + $0x387]]
    %s273 = scalar_lea.vmem %s1, %s272
    %v274 = vld [vmem:[%s273] sm:$0x1]
    %275 = vst.msk [vmem:[#allocation2 + $0x3f] sm:$0x1] %vm22, %v274
    %v276 = vld [vmem:[%s1 + $0x38] sm:$0xff]
    %v277 = vld [vmem:[%s1 + $0x40] sm:$0xff]
    %v278 = vld [vmem:[%s1 + $0x48] sm:$0xff]
    %v279 = vld [vmem:[%s1 + $0x50] sm:$0xff]
    %v280 = vld [vmem:[#allocation2] sm:$0xff]
    %v281 = vtanh.pop %v280
    %v282 = vld [vmem:[#allocation2 + $0x8] sm:$0xff]
    %vm283 = vcmask 261120
    %v285 = vsel %vm283, %v281, 0
    %287 = vmatprep.subr.mxu0 0.0
    %288 = vmatpush1.msra.mxu0 %v276
    %289 = vmatprep.subr.mxu0 0.0
    %290 = vmatpush1.msra.mxu0 %v277
    %291 = vmatprep.subr.mxu0 0.0
    %292 = vmatpush1.msra.mxu0 %v278
    %293 = vmatprep.subr.mxu0 0.0
    %294 = vmatpush1.msra.mxu0 %v279
    %295 = vmatprep.subr.mxu0 0.0
    %296 = vmatpush1.msra.mxu0 0.0
    %297 = vmatprep.subr.mxu0 0.0
    %298 = vmatpush1.msra.mxu0 0.0
    %299 = vmatprep.subr.mxu0 0.0
    %300 = vmatpush1.msra.mxu0 0.0
    %301 = vmatprep.subr.mxu0 0.0
    %302 = vmatpush1.msra.mxu0 0.0
    %303 = vmatprep.subr.mxu0 0.0
    %304 = vmatpush1.msra.mxu0 0.0
    %305 = vmatprep.subr.mxu0 0.0
    %306 = vmatpush1.msra.mxu0 0.0
    %307 = vmatprep.subr.mxu0 0.0
    %308 = vmatpush1.msra.mxu0 0.0
    %309 = vmatprep.subr.mxu0 0.0
    %310 = vmatpush1.msra.mxu0 0.0
    %311 = vmatprep.subr.mxu0 0.0
    %312 = vmatpush1.msra.mxu0 0.0
    %313 = vmatprep.subr.mxu0 0.0
    %314 = vmatpush1.msra.mxu0 0.0
    %315 = vmatprep.subr.mxu0 0.0
    %316 = vmatpush1.msra.mxu0 0.0
    %317 = vmatprep.subr.mxu0 0.0
    %318 = vmatpush1.msra.mxu0 0.0
    %319 = vmatprep.subr.mxu0 0.0
    %320 = vmatpush1.msra.mxu0 0.0
    %321 = vmatprep.subr.mxu0 0.0
    %322 = vmatpush1.msra.mxu0 0.0
    %323 = vmatprep.subr.mxu0 0.0
    %324 = vmatpush1.msra.mxu0 0.0
    %325 = vmatprep.subr.mxu0 0.0
    %326 = vmatpush1.msra.mxu0 0.0
    %327 = vmatprep.subr.mxu0 0.0
    %328 = vmatpush1.msra.mxu0 0.0
    %329 = vmatprep.subr.mxu0 0.0
    %330 = vmatpush1.msra.mxu0 0.0
    %331 = vmatprep.subr.mxu0 0.0
    %332 = vmatpush1.msra.mxu0 0.0
    %333 = vmatprep.subr.mxu0 0.0
    %334 = vmatpush1.msra.mxu0 0.0
    %335 = vmatprep.subr.mxu0 0.0
    %336 = vmatpush1.msra.mxu0 0.0
    %337 = vmatprep.subr.mxu0 0.0
    %338 = vmatpush1.msra.mxu0 0.0
    %339 = vmatprep.subr.mxu0 0.0
    %340 = vmatpush1.msra.mxu0 0.0
    %341 = vmatprep.subr.mxu0 0.0
    %342 = vmatpush1.msra.mxu0 0.0
    %343 = vmatprep.subr.mxu0 0.0
    %344 = vmatpush1.msra.mxu0 0.0
    %345 = vmatprep.subr.mxu0 0.0
    %346 = vmatpush1.msra.mxu0 0.0
    %347 = vmatprep.subr.mxu0 0.0
    %348 = vmatpush1.msra.mxu0 0.0
    %349 = vmatprep.subr.mxu0 0.0
    %350 = vmatpush1.msra.mxu0 0.0
    %351 = vmatprep.mubr.f32.mxu0 0.0
    %352 = vmatmul.mubr.f32.gmra.mrb[0].mxu0 %v285
    %v353 = vpop.f32.mrb[0].mxu0
    %v354 = vadd.f32 0.0, %v353
    %v355 = vpop.f32.mrb[0].mxu0
    %356 = vdwg.mxu0
    %v357 = vadd.f32 %v282, %v354
    %v358 = vtanh.pop %v357
    %v359 = vld [vmem:[#allocation2 + $0x10] sm:$0xff]
    %v361 = vsel %vm283, %v358, 0
    %363 = vmatprep.subr.mxu0 0.0
    %364 = vmatpush1.msra.mxu0 %v276
    %365 = vmatprep.subr.mxu0 0.0
    %366 = vmatpush1.msra.mxu0 %v277
    %367 = vmatprep.subr.mxu0 0.0
    %368 = vmatpush1.msra.mxu0 %v278
    %369 = vmatprep.subr.mxu0 0.0
    %370 = vmatpush1.msra.mxu0 %v279
    %371 = vmatprep.subr.mxu0 0.0
    %372 = vmatpush1.msra.mxu0 0.0
    %373 = vmatprep.subr.mxu0 0.0
    %374 = vmatpush1.msra.mxu0 0.0
    %375 = vmatprep.subr.mxu0 0.0
    %376 = vmatpush1.msra.mxu0 0.0
    %377 = vmatprep.subr.mxu0 0.0
    %378 = vmatpush1.msra.mxu0 0.0
    %379 = vmatprep.subr.mxu0 0.0
    %380 = vmatpush1.msra.mxu0 0.0
    %381 = vmatprep.subr.mxu0 0.0
    %382 = vmatpush1.msra.mxu0 0.0
    %383 = vmatprep.subr.mxu0 0.0
    %384 = vmatpush1.msra.mxu0 0.0
    %385 = vmatprep.subr.mxu0 0.0
    %386 = vmatpush1.msra.mxu0 0.0
    %387 = vmatprep.subr.mxu0 0.0
    %388 = vmatpush1.msra.mxu0 0.0
    %389 = vmatprep.subr.mxu0 0.0
    %390 = vmatpush1.msra.mxu0 0.0
    %391 = vmatprep.subr.mxu0 0.0
    %392 = vmatpush1.msra.mxu0 0.0
    %393 = vmatprep.subr.mxu0 0.0
    %394 = vmatpush1.msra.mxu0 0.0
    %395 = vmatprep.subr.mxu0 0.0
    %396 = vmatpush1.msra.mxu0 0.0
    %397 = vmatprep.subr.mxu0 0.0
    %398 = vmatpush1.msra.mxu0 0.0
    %399 = vmatprep.subr.mxu0 0.0
    %400 = vmatpush1.msra.mxu0 0.0
    %401 = vmatprep.subr.mxu0 0.0
    %402 = vmatpush1.msra.mxu0 0.0
    %403 = vmatprep.subr.mxu0 0.0
    %404 = vmatpush1.msra.mxu0 0.0
    %405 = vmatprep.subr.mxu0 0.0
    %406 = vmatpush1.msra.mxu0 0.0
    %407 = vmatprep.subr.mxu0 0.0
    %408 = vmatpush1.msra.mxu0 0.0
    %409 = vmatprep.subr.mxu0 0.0
    %410 = vmatpush1.msra.mxu0 0.0
    %411 = vmatprep.subr.mxu0 0.0
    %412 = vmatpush1.msra.mxu0 0.0
    %413 = vmatprep.subr.mxu0 0.0
    %414 = vmatpush1.msra.mxu0 0.0
    %415 = vmatprep.subr.mxu0 0.0
    %416 = vmatpush1.msra.mxu0 0.0
    %417 = vmatprep.subr.mxu0 0.0
    %418 = vmatpush1.msra.mxu0 0.0
    %419 = vmatprep.subr.mxu0 0.0
    %420 = vmatpush1.msra.mxu0 0.0
    %421 = vmatprep.subr.mxu0 0.0
    %422 = vmatpush1.msra.mxu0 0.0
    %423 = vmatprep.subr.mxu0 0.0
    %424 = vmatpush1.msra.mxu0 0.0
    %425 = vmatprep.subr.mxu0 0.0
    %426 = vmatpush1.msra.mxu0 0.0
    %427 = vmatprep.mubr.f32.mxu0 0.0
    %428 = vmatmul.mubr.f32.gmra.mrb[0].mxu0 %v361
    %v429 = vpop.f32.mrb[0].mxu0
    %v430 = vadd.f32 0.0, %v429
    %v431 = vpop.f32.mrb[0].mxu0
    %432 = vdwg.mxu0
    %v433 = vadd.f32 %v359, %v430
    %v434 = vtanh.pop %v433
    %v435 = vld [vmem:[#allocation2 + $0x18] sm:$0xff]
    %v437 = vsel %vm283, %v434, 0
    %439 = vmatprep.subr.mxu0 0.0
    %440 = vmatpush1.msra.mxu0 %v276
    %441 = vmatprep.subr.mxu0 0.0
    %442 = vmatpush1.msra.mxu0 %v277
    %443 = vmatprep.subr.mxu0 0.0
    %444 = vmatpush1.msra.mxu0 %v278
    %445 = vmatprep.subr.mxu0 0.0
    %446 = vmatpush1.msra.mxu0 %v279
    %447 = vmatprep.subr.mxu0 0.0
    %448 = vmatpush1.msra.mxu0 0.0
    %449 = vmatprep.subr.mxu0 0.0
    %450 = vmatpush1.msra.mxu0 0.0
    %451 = vmatprep.subr.mxu0 0.0
    %452 = vmatpush1.msra.mxu0 0.0
    %453 = vmatprep.subr.mxu0 0.0
    %454 = vmatpush1.msra.mxu0 0.0
    %455 = vmatprep.subr.mxu0 0.0
    %456 = vmatpush1.msra.mxu0 0.0
    %457 = vmatprep.subr.mxu0 0.0
    %458 = vmatpush1.msra.mxu0 0.0
    %459 = vmatprep.subr.mxu0 0.0
    %460 = vmatpush1.msra.mxu0 0.0
    %461 = vmatprep.subr.mxu0 0.0
    %462 = vmatpush1.msra.mxu0 0.0
    %463 = vmatprep.subr.mxu0 0.0
    %464 = vmatpush1.msra.mxu0 0.0
    %465 = vmatprep.subr.mxu0 0.0
    %466 = vmatpush1.msra.mxu0 0.0
    %467 = vmatprep.subr.mxu0 0.0
    %468 = vmatpush1.msra.mxu0 0.0
    %469 = vmatprep.subr.mxu0 0.0
    %470 = vmatpush1.msra.mxu0 0.0
    %471 = vmatprep.subr.mxu0 0.0
    %472 = vmatpush1.msra.mxu0 0.0
    %473 = vmatprep.subr.mxu0 0.0
    %474 = vmatpush1.msra.mxu0 0.0
    %475 = vmatprep.subr.mxu0 0.0
    %476 = vmatpush1.msra.mxu0 0.0
    %477 = vmatprep.subr.mxu0 0.0
    %478 = vmatpush1.msra.mxu0 0.0
    %479 = vmatprep.subr.mxu0 0.0
    %480 = vmatpush1.msra.mxu0 0.0
    %481 = vmatprep.subr.mxu0 0.0
    %482 = vmatpush1.msra.mxu0 0.0
    %483 = vmatprep.subr.mxu0 0.0
    %484 = vmatpush1.msra.mxu0 0.0
    %485 = vmatprep.subr.mxu0 0.0
    %486 = vmatpush1.msra.mxu0 0.0
    %487 = vmatprep.subr.mxu0 0.0
    %488 = vmatpush1.msra.mxu0 0.0
    %489 = vmatprep.subr.mxu0 0.0
    %490 = vmatpush1.msra.mxu0 0.0
    %491 = vmatprep.subr.mxu0 0.0
    %492 = vmatpush1.msra.mxu0 0.0
    %493 = vmatprep.subr.mxu0 0.0
    %494 = vmatpush1.msra.mxu0 0.0
    %495 = vmatprep.subr.mxu0 0.0
    %496 = vmatpush1.msra.mxu0 0.0
    %497 = vmatprep.subr.mxu0 0.0
    %498 = vmatpush1.msra.mxu0 0.0
    %499 = vmatprep.subr.mxu0 0.0
    %500 = vmatpush1.msra.mxu0 0.0
    %501 = vmatprep.subr.mxu0 0.0
    %502 = vmatpush1.msra.mxu0 0.0
    %503 = vmatprep.mubr.f32.mxu0 0.0
    %504 = vmatmul.mubr.f32.gmra.mrb[0].mxu0 %v437
    %v505 = vpop.f32.mrb[0].mxu0
    %v506 = vadd.f32 0.0, %v505
    %v507 = vpop.f32.mrb[0].mxu0
    %508 = vdwg.mxu0
    %v509 = vadd.f32 %v435, %v506
    %v510 = vtanh.pop %v509
    %v511 = vld [vmem:[#allocation2 + $0x20] sm:$0xff]
    %v513 = vsel %vm283, %v510, 0
    %515 = vmatprep.subr.mxu0 0.0
    %516 = vmatpush1.msra.mxu0 %v276
    %517 = vmatprep.subr.mxu0 0.0
    %518 = vmatpush1.msra.mxu0 %v277
    %519 = vmatprep.subr.mxu0 0.0
    %520 = vmatpush1.msra.mxu0 %v278
    %521 = vmatprep.subr.mxu0 0.0
    %522 = vmatpush1.msra.mxu0 %v279
    %523 = vmatprep.subr.mxu0 0.0
    %524 = vmatpush1.msra.mxu0 0.0
    %525 = vmatprep.subr.mxu0 0.0
    %526 = vmatpush1.msra.mxu0 0.0
    %527 = vmatprep.subr.mxu0 0.0
    %528 = vmatpush1.msra.mxu0 0.0
    %529 = vmatprep.subr.mxu0 0.0
    %530 = vmatpush1.msra.mxu0 0.0
    %531 = vmatprep.subr.mxu0 0.0
    %532 = vmatpush1.msra.mxu0 0.0
    %533 = vmatprep.subr.mxu0 0.0
    %534 = vmatpush1.msra.mxu0 0.0
    %535 = vmatprep.subr.mxu0 0.0
    %536 = vmatpush1.msra.mxu0 0.0
    %537 = vmatprep.subr.mxu0 0.0
    %538 = vmatpush1.msra.mxu0 0.0
    %539 = vmatprep.subr.mxu0 0.0
    %540 = vmatpush1.msra.mxu0 0.0
    %541 = vmatprep.subr.mxu0 0.0
    %542 = vmatpush1.msra.mxu0 0.0
    %543 = vmatprep.subr.mxu0 0.0
    %544 = vmatpush1.msra.mxu0 0.0
    %545 = vmatprep.subr.mxu0 0.0
    %546 = vmatpush1.msra.mxu0 0.0
    %547 = vmatprep.subr.mxu0 0.0
    %548 = vmatpush1.msra.mxu0 0.0
    %549 = vmatprep.subr.mxu0 0.0
    %550 = vmatpush1.msra.mxu0 0.0
    %551 = vmatprep.subr.mxu0 0.0
    %552 = vmatpush1.msra.mxu0 0.0
    %553 = vmatprep.subr.mxu0 0.0
    %554 = vmatpush1.msra.mxu0 0.0
    %555 = vmatprep.subr.mxu0 0.0
    %556 = vmatpush1.msra.mxu0 0.0
    %557 = vmatprep.subr.mxu0 0.0
    %558 = vmatpush1.msra.mxu0 0.0
    %559 = vmatprep.subr.mxu0 0.0
    %560 = vmatpush1.msra.mxu0 0.0
    %561 = vmatprep.subr.mxu0 0.0
    %562 = vmatpush1.msra.mxu0 0.0
    %563 = vmatprep.subr.mxu0 0.0
    %564 = vmatpush1.msra.mxu0 0.0
    %565 = vmatprep.subr.mxu0 0.0
    %566 = vmatpush1.msra.mxu0 0.0
    %567 = vmatprep.subr.mxu0 0.0
    %568 = vmatpush1.msra.mxu0 0.0
    %569 = vmatprep.subr.mxu0 0.0
    %570 = vmatpush1.msra.mxu0 0.0
    %571 = vmatprep.subr.mxu0 0.0
    %572 = vmatpush1.msra.mxu0 0.0
    %573 = vmatprep.subr.mxu0 0.0
    %574 = vmatpush1.msra.mxu0 0.0
    %575 = vmatprep.subr.mxu0 0.0
    %576 = vmatpush1.msra.mxu0 0.0
    %577 = vmatprep.subr.mxu0 0.0
    %578 = vmatpush1.msra.mxu0 0.0
    %579 = vmatprep.mubr.f32.mxu0 0.0
    %580 = vmatmul.mubr.f32.gmra.mrb[0].mxu0 %v513
    %v581 = vpop.f32.mrb[0].mxu0
    %v582 = vadd.f32 0.0, %v581
    %v583 = vpop.f32.mrb[0].mxu0
    %584 = vdwg.mxu0
    %v585 = vadd.f32 %v511, %v582
    %v586 = vtanh.pop %v585
    %v587 = vld [vmem:[#allocation2 + $0x28] sm:$0xff]
    %v589 = vsel %vm283, %v586, 0
    %591 = vmatprep.subr.mxu0 0.0
    %592 = vmatpush1.msra.mxu0 %v276
    %593 = vmatprep.subr.mxu0 0.0
    %594 = vmatpush1.msra.mxu0 %v277
    %595 = vmatprep.subr.mxu0 0.0
    %596 = vmatpush1.msra.mxu0 %v278
    %597 = vmatprep.subr.mxu0 0.0
    %598 = vmatpush1.msra.mxu0 %v279
    %599 = vmatprep.subr.mxu0 0.0
    %600 = vmatpush1.msra.mxu0 0.0
    %601 = vmatprep.subr.mxu0 0.0
    %602 = vmatpush1.msra.mxu0 0.0
    %603 = vmatprep.subr.mxu0 0.0
    %604 = vmatpush1.msra.mxu0 0.0
    %605 = vmatprep.subr.mxu0 0.0
    %606 = vmatpush1.msra.mxu0 0.0
    %607 = vmatprep.subr.mxu0 0.0
    %608 = vmatpush1.msra.mxu0 0.0
    %609 = vmatprep.subr.mxu0 0.0
    %610 = vmatpush1.msra.mxu0 0.0
    %611 = vmatprep.subr.mxu0 0.0
    %612 = vmatpush1.msra.mxu0 0.0
    %613 = vmatprep.subr.mxu0 0.0
    %614 = vmatpush1.msra.mxu0 0.0
    %615 = vmatprep.subr.mxu0 0.0
    %616 = vmatpush1.msra.mxu0 0.0
    %617 = vmatprep.subr.mxu0 0.0
    %618 = vmatpush1.msra.mxu0 0.0
    %619 = vmatprep.subr.mxu0 0.0
    %620 = vmatpush1.msra.mxu0 0.0
    %621 = vmatprep.subr.mxu0 0.0
    %622 = vmatpush1.msra.mxu0 0.0
    %623 = vmatprep.subr.mxu0 0.0
    %624 = vmatpush1.msra.mxu0 0.0
    %625 = vmatprep.subr.mxu0 0.0
    %626 = vmatpush1.msra.mxu0 0.0
    %627 = vmatprep.subr.mxu0 0.0
    %628 = vmatpush1.msra.mxu0 0.0
    %629 = vmatprep.subr.mxu0 0.0
    %630 = vmatpush1.msra.mxu0 0.0
    %631 = vmatprep.subr.mxu0 0.0
    %632 = vmatpush1.msra.mxu0 0.0
    %633 = vmatprep.subr.mxu0 0.0
    %634 = vmatpush1.msra.mxu0 0.0
    %635 = vmatprep.subr.mxu0 0.0
    %636 = vmatpush1.msra.mxu0 0.0
    %637 = vmatprep.subr.mxu0 0.0
    %638 = vmatpush1.msra.mxu0 0.0
    %639 = vmatprep.subr.mxu0 0.0
    %640 = vmatpush1.msra.mxu0 0.0
    %641 = vmatprep.subr.mxu0 0.0
    %642 = vmatpush1.msra.mxu0 0.0
    %643 = vmatprep.subr.mxu0 0.0
    %644 = vmatpush1.msra.mxu0 0.0
    %645 = vmatprep.subr.mxu0 0.0
    %646 = vmatpush1.msra.mxu0 0.0
    %647 = vmatprep.subr.mxu0 0.0
    %648 = vmatpush1.msra.mxu0 0.0
    %649 = vmatprep.subr.mxu0 0.0
    %650 = vmatpush1.msra.mxu0 0.0
    %651 = vmatprep.subr.mxu0 0.0
    %652 = vmatpush1.msra.mxu0 0.0
    %653 = vmatprep.subr.mxu0 0.0
    %654 = vmatpush1.msra.mxu0 0.0
    %655 = vmatprep.mubr.f32.mxu0 0.0
    %656 = vmatmul.mubr.f32.gmra.mrb[0].mxu0 %v589
    %v657 = vpop.f32.mrb[0].mxu0
    %v658 = vadd.f32 0.0, %v657
    %v659 = vpop.f32.mrb[0].mxu0
    %660 = vdwg.mxu0
    %v661 = vadd.f32 %v587, %v658
    %v662 = vtanh.pop %v661
    %v663 = vld [vmem:[#allocation2 + $0x30] sm:$0xff]
    %v665 = vsel %vm283, %v662, 0
    %667 = vmatprep.subr.mxu0 0.0
    %668 = vmatpush1.msra.mxu0 %v276
    %669 = vmatprep.subr.mxu0 0.0
    %670 = vmatpush1.msra.mxu0 %v277
    %671 = vmatprep.subr.mxu0 0.0
    %672 = vmatpush1.msra.mxu0 %v278
    %673 = vmatprep.subr.mxu0 0.0
    %674 = vmatpush1.msra.mxu0 %v279
    %675 = vmatprep.subr.mxu0 0.0
    %676 = vmatpush1.msra.mxu0 0.0
    %677 = vmatprep.subr.mxu0 0.0
    %678 = vmatpush1.msra.mxu0 0.0
    %679 = vmatprep.subr.mxu0 0.0
    %680 = vmatpush1.msra.mxu0 0.0
    %681 = vmatprep.subr.mxu0 0.0
    %682 = vmatpush1.msra.mxu0 0.0
    %683 = vmatprep.subr.mxu0 0.0
    %684 = vmatpush1.msra.mxu0 0.0
    %685 = vmatprep.subr.mxu0 0.0
    %686 = vmatpush1.msra.mxu0 0.0
    %687 = vmatprep.subr.mxu0 0.0
    %688 = vmatpush1.msra.mxu0 0.0
    %689 = vmatprep.subr.mxu0 0.0
    %690 = vmatpush1.msra.mxu0 0.0
    %691 = vmatprep.subr.mxu0 0.0
    %692 = vmatpush1.msra.mxu0 0.0
    %693 = vmatprep.subr.mxu0 0.0
    %694 = vmatpush1.msra.mxu0 0.0
    %695 = vmatprep.subr.mxu0 0.0
    %696 = vmatpush1.msra.mxu0 0.0
    %697 = vmatprep.subr.mxu0 0.0
    %698 = vmatpush1.msra.mxu0 0.0
    %699 = vmatprep.subr.mxu0 0.0
    %700 = vmatpush1.msra.mxu0 0.0
    %701 = vmatprep.subr.mxu0 0.0
    %702 = vmatpush1.msra.mxu0 0.0
    %703 = vmatprep.subr.mxu0 0.0
    %704 = vmatpush1.msra.mxu0 0.0
    %705 = vmatprep.subr.mxu0 0.0
    %706 = vmatpush1.msra.mxu0 0.0
    %707 = vmatprep.subr.mxu0 0.0
    %708 = vmatpush1.msra.mxu0 0.0
    %709 = vmatprep.subr.mxu0 0.0
    %710 = vmatpush1.msra.mxu0 0.0
    %711 = vmatprep.subr.mxu0 0.0
    %712 = vmatpush1.msra.mxu0 0.0
    %713 = vmatprep.subr.mxu0 0.0
    %714 = vmatpush1.msra.mxu0 0.0
    %715 = vmatprep.subr.mxu0 0.0
    %716 = vmatpush1.msra.mxu0 0.0
    %717 = vmatprep.subr.mxu0 0.0
    %718 = vmatpush1.msra.mxu0 0.0
    %719 = vmatprep.subr.mxu0 0.0
    %720 = vmatpush1.msra.mxu0 0.0
    %721 = vmatprep.subr.mxu0 0.0
    %722 = vmatpush1.msra.mxu0 0.0
    %723 = vmatprep.subr.mxu0 0.0
    %724 = vmatpush1.msra.mxu0 0.0
    %725 = vmatprep.subr.mxu0 0.0
    %726 = vmatpush1.msra.mxu0 0.0
    %727 = vmatprep.subr.mxu0 0.0
    %728 = vmatpush1.msra.mxu0 0.0
    %729 = vmatprep.subr.mxu0 0.0
    %730 = vmatpush1.msra.mxu0 0.0
    %731 = vmatprep.mubr.f32.mxu0 0.0
    %732 = vmatmul.mubr.f32.gmra.mrb[0].mxu0 %v665
    %v733 = vpop.f32.mrb[0].mxu0
    %v734 = vadd.f32 0.0, %v733
    %v735 = vpop.f32.mrb[0].mxu0
    %736 = vdwg.mxu0
    %v737 = vadd.f32 %v663, %v734
    %v738 = vtanh.pop %v737
    %v739 = vld [vmem:[#allocation2 + $0x38] sm:$0xff]
    %v741 = vsel %vm283, %v738, 0
    %743 = vmatprep.subr.mxu0 0.0
    %744 = vmatpush1.msra.mxu0 %v276
    %745 = vmatprep.subr.mxu0 0.0
    %746 = vmatpush1.msra.mxu0 %v277
    %747 = vmatprep.subr.mxu0 0.0
    %748 = vmatpush1.msra.mxu0 %v278
    %749 = vmatprep.subr.mxu0 0.0
    %750 = vmatpush1.msra.mxu0 %v279
    %751 = vmatprep.subr.mxu0 0.0
    %752 = vmatpush1.msra.mxu0 0.0
    %753 = vmatprep.subr.mxu0 0.0
    %754 = vmatpush1.msra.mxu0 0.0
    %755 = vmatprep.subr.mxu0 0.0
    %756 = vmatpush1.msra.mxu0 0.0
    %757 = vmatprep.subr.mxu0 0.0
    %758 = vmatpush1.msra.mxu0 0.0
    %759 = vmatprep.subr.mxu0 0.0
    %760 = vmatpush1.msra.mxu0 0.0
    %761 = vmatprep.subr.mxu0 0.0
    %762 = vmatpush1.msra.mxu0 0.0
    %763 = vmatprep.subr.mxu0 0.0
    %764 = vmatpush1.msra.mxu0 0.0
    %765 = vmatprep.subr.mxu0 0.0
    %766 = vmatpush1.msra.mxu0 0.0
    %767 = vmatprep.subr.mxu0 0.0
    %768 = vmatpush1.msra.mxu0 0.0
    %769 = vmatprep.subr.mxu0 0.0
    %770 = vmatpush1.msra.mxu0 0.0
    %771 = vmatprep.subr.mxu0 0.0
    %772 = vmatpush1.msra.mxu0 0.0
    %773 = vmatprep.subr.mxu0 0.0
    %774 = vmatpush1.msra.mxu0 0.0
    %775 = vmatprep.subr.mxu0 0.0
    %776 = vmatpush1.msra.mxu0 0.0
    %777 = vmatprep.subr.mxu0 0.0
    %778 = vmatpush1.msra.mxu0 0.0
    %779 = vmatprep.subr.mxu0 0.0
    %780 = vmatpush1.msra.mxu0 0.0
    %781 = vmatprep.subr.mxu0 0.0
    %782 = vmatpush1.msra.mxu0 0.0
    %783 = vmatprep.subr.mxu0 0.0
    %784 = vmatpush1.msra.mxu0 0.0
    %785 = vmatprep.subr.mxu0 0.0
    %786 = vmatpush1.msra.mxu0 0.0
    %787 = vmatprep.subr.mxu0 0.0
    %788 = vmatpush1.msra.mxu0 0.0
    %789 = vmatprep.subr.mxu0 0.0
    %790 = vmatpush1.msra.mxu0 0.0
    %791 = vmatprep.subr.mxu0 0.0
    %792 = vmatpush1.msra.mxu0 0.0
    %793 = vmatprep.subr.mxu0 0.0
    %794 = vmatpush1.msra.mxu0 0.0
    %795 = vmatprep.subr.mxu0 0.0
    %796 = vmatpush1.msra.mxu0 0.0
    %797 = vmatprep.subr.mxu0 0.0
    %798 = vmatpush1.msra.mxu0 0.0
    %799 = vmatprep.subr.mxu0 0.0
    %800 = vmatpush1.msra.mxu0 0.0
    %801 = vmatprep.subr.mxu0 0.0
    %802 = vmatpush1.msra.mxu0 0.0
    %803 = vmatprep.subr.mxu0 0.0
    %804 = vmatpush1.msra.mxu0 0.0
    %805 = vmatprep.subr.mxu0 0.0
    %806 = vmatpush1.msra.mxu0 0.0
    %807 = vmatprep.mubr.f32.mxu0 0.0
    %808 = vmatmul.mubr.f32.gmra.mrb[0].mxu0 %v741
    %v809 = vpop.f32.mrb[0].mxu0
    %v810 = vadd.f32 0.0, %v809
    %v811 = vpop.f32.mrb[0].mxu0
    %812 = vdwg.mxu0
    %v813 = vadd.f32 %v739, %v810
    %v814 = vtanh.pop %v813
    %v815 = vld [vmem:[%s2] sm:$0xff]
    %v816 = vld [vmem:[%s2 + $0x8] sm:$0xff]
    %v817 = vld [vmem:[%s2 + $0x10] sm:$0xff]
    %v818 = vld [vmem:[%s2 + $0x18] sm:$0xff]
    %v819 = vld [vmem:[%s2 + $0x20] sm:$0x1]
    %v820 = vlaneseq
    %v821 = vshrl.u32 %v820, 7
    %v822 = vsub.s32 0, %v821
    %v823 = vrot.slane %v819, %v822
    %v825 = vsel %vm283, %v814, 0
    %827 = vmatprep.subr.mxu0 0.0
    %828 = vmatpush1.msra.mxu0 %v815
    %829 = vmatprep.subr.mxu0 0.0
    %830 = vmatpush1.msra.mxu0 %v816
    %831 = vmatprep.subr.mxu0 0.0
    %832 = vmatpush1.msra.mxu0 %v817
    %833 = vmatprep.subr.mxu0 0.0
    %834 = vmatpush1.msra.mxu0 %v818
    %835 = vmatprep.subr.mxu0 0.0
    %836 = vmatpush1.msra.mxu0 0.0
    %837 = vmatprep.subr.mxu0 0.0
    %838 = vmatpush1.msra.mxu0 0.0
    %839 = vmatprep.subr.mxu0 0.0
    %840 = vmatpush1.msra.mxu0 0.0
    %841 = vmatprep.subr.mxu0 0.0
    %842 = vmatpush1.msra.mxu0 0.0
    %843 = vmatprep.subr.mxu0 0.0
    %844 = vmatpush1.msra.mxu0 0.0
    %845 = vmatprep.subr.mxu0 0.0
    %846 = vmatpush1.msra.mxu0 0.0
    %847 = vmatprep.subr.mxu0 0.0
    %848 = vmatpush1.msra.mxu0 0.0
    %849 = vmatprep.subr.mxu0 0.0
    %850 = vmatpush1.msra.mxu0 0.0
    %851 = vmatprep.subr.mxu0 0.0
    %852 = vmatpush1.msra.mxu0 0.0
    %853 = vmatprep.subr.mxu0 0.0
    %854 = vmatpush1.msra.mxu0 0.0
    %855 = vmatprep.subr.mxu0 0.0
    %856 = vmatpush1.msra.mxu0 0.0
    %857 = vmatprep.subr.mxu0 0.0
    %858 = vmatpush1.msra.mxu0 0.0
    %859 = vmatprep.subr.mxu0 0.0
    %860 = vmatpush1.msra.mxu0 0.0
    %861 = vmatprep.subr.mxu0 0.0
    %862 = vmatpush1.msra.mxu0 0.0
    %863 = vmatprep.subr.mxu0 0.0
    %864 = vmatpush1.msra.mxu0 0.0
    %865 = vmatprep.subr.mxu0 0.0
    %866 = vmatpush1.msra.mxu0 0.0
    %867 = vmatprep.subr.mxu0 0.0
    %868 = vmatpush1.msra.mxu0 0.0
    %869 = vmatprep.subr.mxu0 0.0
    %870 = vmatpush1.msra.mxu0 0.0
    %871 = vmatprep.subr.mxu0 0.0
    %872 = vmatpush1.msra.mxu0 0.0
    %873 = vmatprep.subr.mxu0 0.0
    %874 = vmatpush1.msra.mxu0 0.0
    %875 = vmatprep.subr.mxu0 0.0
    %876 = vmatpush1.msra.mxu0 0.0
    %877 = vmatprep.subr.mxu0 0.0
    %878 = vmatpush1.msra.mxu0 0.0
    %879 = vmatprep.subr.mxu0 0.0
    %880 = vmatpush1.msra.mxu0 0.0
    %881 = vmatprep.subr.mxu0 0.0
    %882 = vmatpush1.msra.mxu0 0.0
    %883 = vmatprep.subr.mxu0 0.0
    %884 = vmatpush1.msra.mxu0 0.0
    %885 = vmatprep.subr.mxu0 0.0
    %886 = vmatpush1.msra.mxu0 0.0
    %887 = vmatprep.subr.mxu0 0.0
    %888 = vmatpush1.msra.mxu0 0.0
    %889 = vmatprep.subr.mxu0 0.0
    %890 = vmatpush1.msra.mxu0 0.0
    %891 = vmatprep.mubr.f32.mxu0 0.0
    %892 = vmatmul.mubr.f32.gmra.mrb[0].mxu0 %v825
    %v893 = vpop.f32.mrb[0].mxu0
    %v894 = vadd.f32 %v823, %v893
    %v895 = vpop.f32.mrb[0].mxu0
    %896 = vdwg.mxu0
    %897 = vst [vmem:[#allocation5] sm:$0xff] %v894
    // Predicated region
    $region10: #{tpu_custom_call.1} parent=1 // pred_check
      _
    $region11: #{tpu_custom_call.1} parent=1 // pred_check_branch
      %899 = sbr.rel (0) target = $region13
    $region12: #{tpu_custom_call.1} parent=1 // pred_region
      %s901 = ssub.s32 128, 128
      %902 = vsyncadd [#allocation6], %s901
      %s904 = sshll.u32 [#allocation5], 4
      %s905 = int_to_ptr.vmem [resolvable:$true] %s904
      %907 = dma.vmem_to_hbm [thread:$0]  %s905, 128, %s3, [#allocation6]
    $region13: #{tpu_custom_call.1} parent=1 // pred_fallthru
      _
    // Predicated region
    $region14: #{tpu_custom_call.1} parent=1 // pred_check
      _
    $region15: #{tpu_custom_call.1} parent=1 // pred_check_branch
      %909 = sbr.rel (0) target = $region17
    $region16: #{tpu_custom_call.1} parent=1 // pred_region
      %910 = dma.done [#allocation6], 128
    $region17: #{tpu_custom_call.1} parent=1 // pred_fallthru
      _
    %911 = vsyncpa [#allocation6], 1

</llo_original>
